<compile_context>
chip_gen: v7x
topology: tpu7x:2x2x1
jax: 0.10.0
libtpu: 0.0.40
codegen_flags: <defaults>
</compile_context>

<pallas_src>
import functools
import math

import numpy as np
import jax
import jax.numpy as jnp
from jax.experimental import pallas as pl
from jax.experimental.pallas import tpu as pltpu

EPS = 1e-5  # nn.InstanceNorm2d default eps


# ------------------------------ small helpers -------------------------------

def _rup(x, m):
    return (x + m - 1) // m * m


def _cparams():
    return pltpu.CompilerParams(dimension_semantics=("parallel",),
                                vmem_limit_bytes=32 * 1024 * 1024)


def _pick_tile(m, target):
    t = min(m, target)
    if m % t:
        t = math.gcd(m, t)
    if t % 8 and t != m:
        t = m
    return t


@functools.lru_cache(maxsize=None)
def _edge_mask_np(H, W):
    """(H*W, 2) f32: col 0 valid for column tap -1, col 1 valid for tap +1."""
    w_idx = np.arange(H * W) % W
    return np.stack([(w_idx != 0), (w_idx != W - 1)], axis=1).astype(np.float32)


# ---------------------------- in-kernel helpers ------------------------------

def _inorm(y):
    """InstanceNorm (no affine) over the flattened spatial axis of (HW, C)."""
    mean = jnp.mean(y, axis=0, keepdims=True)
    yc = y - mean
    var = jnp.mean(yc * yc, axis=0, keepdims=True)   # biased, like PyTorch IN
    return yc * jax.lax.rsqrt(var + EPS)


def _conv3x3_flat(y, w_ref, t, pad_ref, mask_l, mask_r, H, W, c_out, S):
    """3x3 stride-1 'same' conv on a flat (H*W, C_in) activation.

    w_ref[t] is the (9*C_in, C_out) bf16 weight of block t; pad_ref is a
    (2*S + H*W, C_in) f32 VMEM scratch whose border rows are already zero
    (emulating zero padding); mask_l / mask_r are (H*W, 1) column-validity
    masks for the -1 / +1 column taps.
    """
    HW = H * W
    c_in = y.shape[-1]
    pad_ref[S:S + HW, :] = y
    acc = jnp.zeros((HW, c_out), jnp.float32)
    for b_off in range(3):                       # column tap offset (-1, 0, +1)
        part = jnp.zeros((HW, c_out), jnp.float32)
        for a_off in range(3):                   # row tap offset
            tap = a_off * 3 + b_off
            start = S + (a_off - 1) * W + (b_off - 1)
            patch = pad_ref[start:start + HW, :]
            part = part + jnp.dot(patch.astype(jnp.bfloat16),
                                  w_ref[t, tap * c_in:(tap + 1) * c_in, :],
                                  preferred_element_type=jnp.float32)
        if b_off == 0:
            part = part * mask_l
        elif b_off == 2:
            part = part * mask_r
        acc = acc + part
    return acc


# -------------------------------- kernels ------------------------------------

def _bottleneck_seq_kernel(x_ref, m_ref, w1_ref, b1_ref, w2_ref, b2_ref,
                           w3_ref, b3_ref, o_ref, pad_ref,
                           *, n_blocks, H, W, C, S):
    pad_ref[...] = jnp.zeros(pad_ref.shape, jnp.float32)   # zero borders once
    mask_l = m_ref[:, 0:1]
    mask_r = m_ref[:, 1:2]
    y = x_ref[0]
    for t in range(n_blocks):
        res = y
        z = jnp.maximum(_inorm(y), 0.0)                              # bn1+relu
        z = jnp.dot(z.astype(jnp.bfloat16), w1_ref[t],
                    preferred_element_type=jnp.float32) + b1_ref[t]  # conv 1x1
        z = jnp.maximum(_inorm(z), 0.0)                              # bn2+relu
        z = _conv3x3_flat(z, w2_ref, t, pad_ref, mask_l, mask_r,
                          H, W, C, S) + b2_ref[t]                    # conv 3x3
        z = jnp.maximum(_inorm(z), 0.0)                              # bn3+relu
        z = jnp.dot(z.astype(jnp.bfloat16), w3_ref[t],
                    preferred_element_type=jnp.float32) + b3_ref[t]  # conv 1x1
        y = z + res                                                  # residual
    o_ref[0] = y


def _resblock_seq_kernel(x_ref, m_ref, w1_ref, g1_ref, be1_ref, a_ref,
                         w2_ref, g2_ref, be2_ref, o_ref, pad_ref,
                         *, n_blocks, H, W, C, S):
    pad_ref[...] = jnp.zeros(pad_ref.shape, jnp.float32)   # zero borders once
    mask_l = m_ref[:, 0:1]
    mask_r = m_ref[:, 1:2]
    y = x_ref[0]
    for t in range(n_blocks):
        res = y
        z = _conv3x3_flat(y, w1_ref, t, pad_ref, mask_l, mask_r, H, W, C, S)
        z = _inorm(z) * g1_ref[t] + be1_ref[t]                       # IN affine
        z = jnp.where(z > 0.0, z, a_ref[t] * z)                      # PReLU
        z = _conv3x3_flat(z, w2_ref, t, pad_ref, mask_l, mask_r, H, W, C, S)
        z = _inorm(z) * g2_ref[t] + be2_ref[t]
        y = z + res
    o_ref[0] = y


def _stem_kernel(p_ref, w_ref, o_ref):
    # im2col patches (HW, 147) bf16 x (147, ngf) bf16 -> IN -> ReLU, fused.
    z = jnp.dot(p_ref[0], w_ref[...], preferred_element_type=jnp.float32)
    o_ref[0] = jnp.maximum(_inorm(z), 0.0)


def _maxpool_kernel(x_ref, o_ref, *, H, W, C):
    """2x2/stride-2 max pool.

    Input view is (1, H*(W//2), 2*C): W-pairs pre-merged into the lane dim by
    a contiguous JAX reshape.  Only whole-block loads, value-level contiguous
    slices and a single dense store are used (no strided ref indexing).
    """
    H2, W2 = H // 2, W // 2
    x = x_ref[0]                                   # (H*W2, 2C)
    rows = []
    for i in range(H2):                            # static loop over H pairs
        r0 = x[(2 * i) * W2:(2 * i + 1) * W2, :]   # row h = 2i      (W2, 2C)
        r1 = x[(2 * i + 1) * W2:(2 * i + 2) * W2, :]   # row h = 2i+1
        m = jnp.maximum(r0, r1)                    # H-direction max
        rows.append(jnp.maximum(m[:, :C], m[:, C:]))   # W-direction max
    o_ref[0] = jnp.concatenate(rows, axis=0)       # one dense (H2*W2, C) store


def _add_kernel(a_ref, b_ref, o_ref):
    o_ref[...] = a_ref[...] + b_ref[...]


def _head_kernel(x_ref, w_ref, b_ref, o_ref):
    o_ref[...] = jnp.dot(x_ref[...].astype(jnp.bfloat16), w_ref[...],
                         preferred_element_type=jnp.float32) + b_ref[...]


# ------------------------------- op wrappers ---------------------------------

@jax.jit
def bottleneck_seq_fwd(p, x):
    """Sequence of Bottleneck blocks (shared resolution), fused in one kernel."""
    N, H, W, C = x.shape
    HW = H * W
    B = p["w1"].shape[0]
    S = _rup(W + 1, 8)
    mask = jnp.asarray(_edge_mask_np(H, W))
    xf = x.reshape(N, HW, C)
    out = pl.pallas_call(
        functools.partial(_bottleneck_seq_kernel,
                          n_blocks=B, H=H, W=W, C=C, S=S),
        out_shape=jax.ShapeDtypeStruct((N, HW, C), jnp.float32),
        grid=(N,),
        in_specs=[
            pl.BlockSpec((1, HW, C), lambda n: (n, 0, 0)),
            pl.BlockSpec((HW, 2), lambda n: (0, 0)),
            pl.BlockSpec((B, C, C), lambda n: (0, 0, 0)),
            pl.BlockSpec((B, 1, C), lambda n: (0, 0, 0)),
            pl.BlockSpec((B, 9 * C, C), lambda n: (0, 0, 0)),
            pl.BlockSpec((B, 1, C), lambda n: (0, 0, 0)),
            pl.BlockSpec((B, C, C), lambda n: (0, 0, 0)),
            pl.BlockSpec((B, 1, C), lambda n: (0, 0, 0)),
        ],
        out_specs=pl.BlockSpec((1, HW, C), lambda n: (n, 0, 0)),
        scratch_shapes=[pltpu.VMEM((2 * S + HW, C), jnp.float32)],
        compiler_params=_cparams(),
    )(xf, mask, p["w1"], p["b1"], p["w2"], p["b2"], p["w3"], p["b3"])
    return out.reshape(N, H, W, C)


@jax.jit
def resblock_seq_fwd(p, x):
    """Sequence of _Residual_Block blocks, fused in one kernel."""
    N, H, W, C = x.shape
    HW = H * W
    B = p["w1"].shape[0]
    S = _rup(W + 1, 8)
    mask = jnp.asarray(_edge_mask_np(H, W))
    xf = x.reshape(N, HW, C)
    out = pl.pallas_call(
        functools.partial(_resblock_seq_kernel,
                          n_blocks=B, H=H, W=W, C=C, S=S),
        out_shape=jax.ShapeDtypeStruct((N, HW, C), jnp.float32),
        grid=(N,),
        in_specs=[
            pl.BlockSpec((1, HW, C), lambda n: (n, 0, 0)),
            pl.BlockSpec((HW, 2), lambda n: (0, 0)),
            pl.BlockSpec((B, 9 * C, C), lambda n: (0, 0, 0)),
            pl.BlockSpec((B, 1, C), lambda n: (0, 0, 0)),
            pl.BlockSpec((B, 1, C), lambda n: (0, 0, 0)),
            pl.BlockSpec((B, 1, C), lambda n: (0, 0, 0)),
            pl.BlockSpec((B, 9 * C, C), lambda n: (0, 0, 0)),
            pl.BlockSpec((B, 1, C), lambda n: (0, 0, 0)),
            pl.BlockSpec((B, 1, C), lambda n: (0, 0, 0)),
        ],
        out_specs=pl.BlockSpec((1, HW, C), lambda n: (n, 0, 0)),
        scratch_shapes=[pltpu.VMEM((2 * S + HW, C), jnp.float32)],
        compiler_params=_cparams(),
    )(xf, mask, p["w1"], p["g1"], p["b1"], p["a"], p["w2"], p["g2"], p["b2"])
    return out.reshape(N, H, W, C)


@jax.jit
def stem_fwd(p, x):
    """ReflectionPad(3) + 7x7 conv (no bias) + InstanceNorm + ReLU."""
    N, H, W, Cin = x.shape
    k, pad = 7, 3
    cout = p["w"].shape[-1]
    xp = jnp.pad(x, ((0, 0), (pad, pad), (pad, pad), (0, 0)), mode="reflect")
    # One-time JAX-side im2col (Cin=3, tiny); the matmul + IN + ReLU is fused.
    patches = jnp.concatenate(
        [xp[:, i:i + H, j:j + W, :] for i in range(k) for j in range(k)],
        axis=-1).reshape(N, H * W, k * k * Cin).astype(jnp.bfloat16)
    K = k * k * Cin
    out = pl.pallas_call(
        _stem_kernel,
        out_shape=jax.ShapeDtypeStruct((N, H * W, cout), jnp.float32),
        grid=(N,),
        in_specs=[pl.BlockSpec((1, H * W, K), lambda n: (n, 0, 0)),
                  pl.BlockSpec((K, cout), lambda n: (0, 0))],
        out_specs=pl.BlockSpec((1, H * W, cout), lambda n: (n, 0, 0)),
        compiler_params=_cparams(),
    )(patches, p["w"])
    return out.reshape(N, H, W, cout)


@jax.jit
def maxpool2x2(x):
    N, H, W, C = x.shape
    H2, W2 = H // 2, W // 2
    # Contiguous (metadata-only) reshape: merge each W-pair into the lane dim.
    xf = x.reshape(N, H * W2, 2 * C)
    out = pl.pallas_call(
        functools.partial(_maxpool_kernel, H=H, W=W, C=C),
        out_shape=jax.ShapeDtypeStruct((N, H2 * W2, C), jnp.float32),
        grid=(N,),
        in_specs=[pl.BlockSpec((1, H * W2, 2 * C), lambda n: (n, 0, 0))],
        out_specs=pl.BlockSpec((1, H2 * W2, C), lambda n: (n, 0, 0)),
        compiler_params=_cparams(),
    )(xf)
    return out.reshape(N, H2, W2, C)


@jax.jit
def upsample_add(up1, low3):
    """out = up1 + nearest_upsample_2x(low3), add is a lane-dense kernel."""
    # TODO(synk): the 2x nearest upsample stays in JAX glue; an in-kernel
    # sublane/lane interleave has no low-risk Pallas mapping and its HBM cost
    # is negligible at these shapes.
    up2 = jnp.repeat(jnp.repeat(low3, 2, axis=1), 2, axis=2)
    N, H, W, C = up1.shape
    tot = N * H * W * C
    if tot % 128 == 0:
        rows, cols = tot // 128, 128          # lane-dense (full 128-lane) view
    else:
        rows, cols = N * H * W, C
    a = up1.reshape(rows, cols)
    b = up2.reshape(rows, cols)
    tm = _pick_tile(rows, 2048)
    out = pl.pallas_call(
        _add_kernel,
        out_shape=jax.ShapeDtypeStruct((rows, cols), jnp.float32),
        grid=(rows // tm,),
        in_specs=[pl.BlockSpec((tm, cols), lambda i: (i, 0))] * 2,
        out_specs=pl.BlockSpec((tm, cols), lambda i: (i, 0)),
        compiler_params=_cparams(),
    )(a, b)
    return out.reshape(N, H, W, C)


@functools.partial(jax.jit, static_argnames=("n_parsing",))
def head_fwd(p, x, n_parsing):
    """Merged fc (parsing, bias) + fc_landmark (no bias) as one tiled matmul."""
    N, H, W, C = x.shape
    M = N * H * W
    cout = p["w"].shape[-1]
    x2 = x.reshape(M, C)
    tm = _pick_tile(M, 2048)
    out = pl.pallas_call(
        _head_kernel,
        out_shape=jax.ShapeDtypeStruct((M, cout), jnp.float32),
        grid=(M // tm,),
        in_specs=[pl.BlockSpec((tm, C), lambda i: (i, 0)),
                  pl.BlockSpec((C, cout), lambda i: (0, 0)),
                  pl.BlockSpec((1, cout), lambda i: (0, 0))],
        out_specs=pl.BlockSpec((tm, cout), lambda i: (i, 0)),
        compiler_params=_cparams(),
    )(x2, p["w"], p["b"])
    out = out.reshape(N, H, W, cout)
    return out[..., :n_parsing], out[..., n_parsing:]


# ------------------------------ network blocks -------------------------------

def hourglass_fwd(hg, n, x):
    up1 = bottleneck_seq_fwd(hg[n - 1][0], x)
    low1 = maxpool2x2(x)
    low1 = bottleneck_seq_fwd(hg[n - 1][1], low1)
    if n > 1:
        low2 = hourglass_fwd(hg, n - 1, low1)
    else:
        low2 = bottleneck_seq_fwd(hg[0][3], low1)
    low3 = bottleneck_seq_fwd(hg[n - 1][2], low2)
    return upsample_add(up1, low3)


def prior_estimation_fwd(params, x_nchw, depth=4, parsing_classes=13):
    x = jnp.transpose(x_nchw, (0, 2, 3, 1)).astype(jnp.float32)   # NCHW -> NHWC
    out = stem_fwd(params["stem"], x)
    out = resblock_seq_fwd(params["res_blocks"], out)
    for hg in params["hourglasses"]:
        out = hourglass_fwd(hg, depth, out)
    parsing, landmark = head_fwd(params["head"], out, n_parsing=parsing_classes)
    to_nchw = lambda t: jnp.transpose(t, (0, 3, 1, 2))
    return to_nchw(out), to_nchw(landmark), to_nchw(parsing)


# ------------------------------ parameter init -------------------------------

class _KeyGen:
    def __init__(self, seed):
        self._key = jax.random.PRNGKey(seed)

    def __call__(self):
        self._key, sub = jax.random.split(self._key)
        return sub


def _rand_w(kg, k_in, c_out):
    return (0.05 * jax.random.normal(kg(), (k_in, c_out), jnp.float32)
            ).astype(jnp.bfloat16)


def _rand_b(kg, c_out):
    return 0.05 * jax.random.normal(kg(), (1, c_out), jnp.float32)


def _bottleneck_seq_init(kg, c, n_blocks):
    def stack(fn):
        return jnp.stack([fn() for _ in range(n_blocks)], axis=0)
    return {"w1": stack(lambda: _rand_w(kg, c, c)),
            "b1": stack(lambda: _rand_b(kg, c)),
            "w2": stack(lambda: _rand_w(kg, 9 * c, c)),
            "b2": stack(lambda: _rand_b(kg, c)),
            "w3": stack(lambda: _rand_w(kg, c, c)),
            "b3": stack(lambda: _rand_b(kg, c))}


def _resblock_seq_init(kg, c, n_blocks):
    def stack(fn):
        return jnp.stack([fn() for _ in range(n_blocks)], axis=0)
    return {"w1": stack(lambda: _rand_w(kg, 9 * c, c)),
            "g1": jnp.ones((n_blocks, 1, c), jnp.float32),
            "b1": jnp.zeros((n_blocks, 1, c), jnp.float32),
            "a": jnp.full((n_blocks, 1, c), 0.25, jnp.float32),
            "w2": stack(lambda: _rand_w(kg, 9 * c, c)),
            "g2": jnp.ones((n_blocks, 1, c), jnp.float32),
            "b2": jnp.zeros((n_blocks, 1, c), jnp.float32)}


def init_params(kg, ngf, n_blocks, n_hourglass, parsing_classes, num_landmark,
                depth=4, num_bottleneck=3):
    params = {"stem": {"w": _rand_w(kg, 7 * 7 * 3, ngf)},
              "res_blocks": _resblock_seq_init(kg, ngf, n_blocks),
              "hourglasses": []}
    for _ in range(n_hourglass):
        hg = []
        for i in range(depth):
            res = [_bottleneck_seq_init(kg, ngf, num_bottleneck)
                   for _ in range(3)]
            if i == 0:
                res.append(_bottleneck_seq_init(kg, ngf, num_bottleneck))
            hg.append(res)
        params["hourglasses"].append(hg)
    w_fc = 0.05 * jax.random.normal(kg(), (ngf, parsing_classes), jnp.float32)
    b_fc = 0.05 * jax.random.normal(kg(), (1, parsing_classes), jnp.float32)
    w_lm = 0.05 * jax.random.normal(kg(), (ngf, num_landmark), jnp.float32)
    params["head"] = {
        "w": jnp.concatenate([w_fc, w_lm], axis=1).astype(jnp.bfloat16),
        "b": jnp.concatenate([b_fc, jnp.zeros((1, num_landmark), jnp.float32)],
                             axis=1)}
    return params


# ----------------------------------- main ------------------------------------

if __name__ == "__main__":
    # Reduced-but-faithful config (module defaults: n_hourglass=4, n_blocks=2,
    # ngf=64); Hourglass depth=4 and num_blocks=3 are hard-coded as in the spec.
    NGF, N_BLOCKS, N_HOURGLASS = 32, 2, 2
    PARSING_CLASSES, NUM_LANDMARK = 13, 68
    DEPTH, NUM_BOTTLENECK = 4, 3

    kg = _KeyGen(42)
    params = init_params(kg, NGF, N_BLOCKS, N_HOURGLASS, PARSING_CLASSES,
                         NUM_LANDMARK, DEPTH, NUM_BOTTLENECK)

    # NCHW input like the PyTorch module; H, W divisible by 2**depth.
    x = jax.random.normal(jax.random.PRNGKey(0), (2, 3, 32, 32), jnp.float32)

    out, landmark, parsing = prior_estimation_fwd(
        params, x, depth=DEPTH, parsing_classes=PARSING_CLASSES)
    jax.block_until_ready((out, landmark, parsing))

    assert out.shape == (2, NGF, 32, 32)
    assert landmark.shape == (2, NUM_LANDMARK, 32, 32)
    assert parsing.shape == (2, PARSING_CLASSES, 32, 32)
    assert out.dtype == landmark.dtype == parsing.dtype == jnp.float32
    print("KERNEL_OK")
</pallas_src>

<mosaic_0001>
module attributes {stable_mosaic.version = 11 : i64} {
  func.func @_stem_kernel(%arg0: i32, %arg1: memref<1x1024x147xbf16, #tpu.memory_space<vmem>>, %arg2: memref<147x32xbf16, #tpu.memory_space<vmem>>, %arg3: memref<1x1024x32xf32, #tpu.memory_space<vmem>>) attributes {dimension_semantics = [#tpu.dimension_semantics<parallel>], iteration_bounds = array<i64: 2>, scalar_prefetch = 0 : i64, scratch_operands = 0 : i64, tpu.core_type = #tpu.core_type<tc>, window_params = [{transform_indices = @transform_0, window_bounds = array<i64: 1, 1024, 147>}, {pipeline_mode = #tpu.pipeline_mode<synchronous>, transform_indices = @transform_1, window_bounds = array<i64: 147, 32>}, {transform_indices = @transform_2, window_bounds = array<i64: 1, 1024, 32>}]} {
    %c0 = arith.constant 0 : index
    %c0_0 = arith.constant 0 : index
    %c0_1 = arith.constant 0 : index
    %0 = vector.load %arg1[%c0, %c0_0, %c0_1] : memref<1x1024x147xbf16, #tpu.memory_space<vmem>>, vector<1x1024x147xbf16>
    %1 = vector.shape_cast %0 : vector<1x1024x147xbf16> to vector<1024x147xbf16>
    %c0_2 = arith.constant 0 : index
    %c0_3 = arith.constant 0 : index
    %2 = vector.load %arg2[%c0_2, %c0_3] : memref<147x32xbf16, #tpu.memory_space<vmem>>, vector<147x32xbf16>
    %cst = arith.constant dense<0.000000e+00> : vector<1024x32xf32>
    %3 = tpu.matmul %1, %2, %cst {dimension_numbers = #tpu.dot_dimension_numbers<[1], [0], [0], [1], [0, 0, 1, 1], [], []>} : vector<1024x147xbf16>, vector<147x32xbf16>, vector<1024x32xf32> -> vector<1024x32xf32>
    %cst_4 = arith.constant dense<0.000000e+00> : vector<32xf32>
    %4 = vector.multi_reduction <add>, %3, %cst_4 [0] : vector<1024x32xf32> to vector<32xf32>
    %5 = vector.shape_cast %4 : vector<32xf32> to vector<1x32xf32>
    %cst_5 = arith.constant 1.024000e+03 : f32
    %6 = vector.broadcast %cst_5 : f32 to vector<1x32xf32>
    %7 = arith.divf %5, %6 : vector<1x32xf32>
    %8 = vector.broadcast %7 : vector<1x32xf32> to vector<1024x32xf32>
    %9 = arith.subf %3, %8 : vector<1024x32xf32>
    %10 = arith.mulf %9, %9 : vector<1024x32xf32>
    %cst_6 = arith.constant dense<0.000000e+00> : vector<32xf32>
    %11 = vector.multi_reduction <add>, %10, %cst_6 [0] : vector<1024x32xf32> to vector<32xf32>
    %12 = vector.shape_cast %11 : vector<32xf32> to vector<1x32xf32>
    %cst_7 = arith.constant 1.024000e+03 : f32
    %13 = vector.broadcast %cst_7 : f32 to vector<1x32xf32>
    %14 = arith.divf %12, %13 : vector<1x32xf32>
    %cst_8 = arith.constant 9.99999974E-6 : f32
    %15 = vector.broadcast %cst_8 : f32 to vector<1x32xf32>
    %16 = arith.addf %14, %15 : vector<1x32xf32>
    %17 = math.rsqrt %16 : vector<1x32xf32>
    %18 = vector.broadcast %17 : vector<1x32xf32> to vector<1024x32xf32>
    %19 = arith.mulf %9, %18 : vector<1024x32xf32>
    %cst_9 = arith.constant 0.000000e+00 : f32
    %20 = vector.broadcast %cst_9 : f32 to vector<1024x32xf32>
    %21 = arith.maximumf %19, %20 : vector<1024x32xf32>
    %c0_10 = arith.constant 0 : index
    %c0_11 = arith.constant 0 : index
    %c0_12 = arith.constant 0 : index
    %22 = vector.load %arg3[%c0_10, %c0_11, %c0_12] : memref<1x1024x32xf32, #tpu.memory_space<vmem>>, vector<1x1024x32xf32>
    %23 = vector.shape_cast %22 : vector<1x1024x32xf32> to vector<1024x32xf32>
    %24 = vector.shape_cast %21 : vector<1024x32xf32> to vector<1x1024x32xf32>
    tpu.vector_store %arg3[%c0_10, %c0_11, %c0_12], %24 {strides = array<i32>} : memref<1x1024x32xf32, #tpu.memory_space<vmem>>, vector<1x1024x32xf32>,
    return
  }
  func.func @transform_0(%arg0: i32) -> (i32, i32, i32) {
    %c0_i32 = arith.constant 0 : i32
    %c0_i32_0 = arith.constant 0 : i32
    %c0_i32_1 = arith.constant 0 : i32
    return %arg0, %c0_i32, %c0_i32_0 : i32, i32, i32
  }
  func.func @transform_1(%arg0: i32) -> (i32, i32) {
    %c0_i32 = arith.constant 0 : i32
    %c0_i32_0 = arith.constant 0 : i32
    %c0_i32_1 = arith.constant 0 : i32
    return %c0_i32, %c0_i32_0 : i32, i32
  }
  func.func @transform_2(%arg0: i32) -> (i32, i32, i32) {
    %c0_i32 = arith.constant 0 : i32
    %c0_i32_0 = arith.constant 0 : i32
    %c0_i32_1 = arith.constant 0 : i32
    return %arg0, %c0_i32, %c0_i32_0 : i32, i32, i32
  }
}

</mosaic_0001>

<llo_original>
// kernel: stem_fwd.1
$region0: #{stem_fwd.1}
  #allocation0 [shape = 'u32[]', space=smem, size = 0x4, offset = 0x4, fixed_abs, tag = 'smem constant byte address 0x4 - core index']
  #allocation1 [shape = 'u32[144,128]{1,0:T(1,128)}', space=vmem, size = 0x12000, scoped, tag = 'internal scratch']
  %s0 = inlined_call_operand.vmem [shape: bf16[2,1024,147], index: 0, kind: input, shape index: {}]
  %s1 = inlined_call_operand.vmem [shape: bf16[147,32], index: 1, kind: input, shape index: {}]
  %s2 = inlined_call_operand.hbm [shape: f32[2,1024,32], index: 2, kind: output, shape index: {}]
  %s3 = sld [smem:[#allocation0]]
  $region41: #{stem_fwd.1} parent=0
    _
  %s5 = ssub.s32 1, %s3
  %s6 = scalar_select 0, %s5, %s3
  $region1: #{stem_fwd.1} parent=0
    #allocation2 [shape = 'u8[1048576]{0}', space=vmem, size = 0x100000, scoped, tag = 'output window, operand 0']
    #allocation3 [shape = 's32[2]{0}', space=sflag, size = 0x8, scoped, tag = 'scoped memory for stem_fwd.1']
    %7 = vsyncpa [#allocation3], 0
    %s8 = scalar_lea.sflag [#allocation3], 1
    %9 = vsyncpa %s8, 0
    loop: start=0, step=1, limit=4
    $region2: #{stem_fwd.1} parent=1 // loop_pre_header
      _
    $region3: #{stem_fwd.1} parent=1 // loop_header
      %s11 = sphi 0, %s15
      %p12 = scmp.ge.s32.totalorder %s11, 4
      %s21 = sphi 0, %s23
      %s24 = sphi 0, %s21
      %s25 = sphi 0, %s24
      %s41 = sphi 0, %s25
      %s45 = sphi 0, %s45
      %s47 = sphi 0, %s45
      %s48 = sphi 0, %s47
      %s62 = sphi 0, %s48
      %s68 = sphi 0, %s70
      %s71 = sphi 0, %s68
      %s72 = sphi 0, %s71
      %s88 = sphi 0, %s72
    $region4: #{stem_fwd.1} parent=1 // loop_header_branch
      %14 = sbr.rel (%p12) target = $region8
    $region5: #{stem_fwd.1} parent=1 // loop_body
      %s16 = ssub.s32 %s11, 1
      %s17 = ssub.s32 %s11, 2
      %s18 = sadd.s32 %s11, 1
      %s19 = ssub.s32 %s11, %s18
      %p20 = scmp.eq.s32.totalorder %s19, 0
      %s22 = sadd.s32 %s21, 1
      %s23 = scalar_select %p20, %s21, %s22
      %p26 = pneg %p20
      %p27 = scmp.eq.s32.totalorder %s11, 1
      %p28 = por %p26, %p27
      %p29 = scmp.ne.s32.totalorder %s21, %s24
      %p30 = scmp.eq.s32.totalorder %s11, 0
      %p31 = por %p29, %p30
      %p32 = scmp.ne.s32.totalorder %s21, %s24
      %p33 = scmp.eq.s32.totalorder %s16, 1
      %p34 = por %p32, %p33
      %p35 = scmp.ne.s32.totalorder %s24, %s25
      %p36 = scmp.eq.s32.totalorder %s16, 0
      %p37 = por %p35, %p36
      %p38 = scmp.ne.s32.totalorder %s24, %s25
      %p39 = scmp.eq.s32.totalorder %s17, 1
      %p40 = por %p38, %p39
      %p42 = scmp.ne.s32.totalorder %s25, %s41
      %p43 = scmp.eq.s32.totalorder %s17, 0
      %p44 = por %p42, %p43
      %s46 = sadd.s32 %s45, 1
      %p49 = scmp.eq.s32.totalorder %s11, 1
      %p50 = scmp.ne.s32.totalorder %s45, %s47
      %p51 = scmp.eq.s32.totalorder %s11, 0
      %p52 = por %p50, %p51
      %p53 = scmp.ne.s32.totalorder %s45, %s47
      %p54 = scmp.eq.s32.totalorder %s16, 1
      %p55 = por %p53, %p54
      %p56 = scmp.ne.s32.totalorder %s47, %s48
      %p57 = scmp.eq.s32.totalorder %s16, 0
      %p58 = por %p56, %p57
      %p59 = scmp.ne.s32.totalorder %s47, %s48
      %p60 = scmp.eq.s32.totalorder %s17, 1
      %p61 = por %p59, %p60
      %p63 = scmp.ne.s32.totalorder %s48, %s62
      %p64 = scmp.eq.s32.totalorder %s17, 0
      %p65 = por %p63, %p64
      %s66 = ssub.s32 %s11, %s18
      %p67 = scmp.eq.s32.totalorder %s66, 0
      %s69 = sadd.s32 %s68, 1
      %s70 = scalar_select %p67, %s68, %s69
      %p73 = pneg %p67
      %p74 = scmp.eq.s32.totalorder %s11, 1
      %p75 = por %p73, %p74
      %p76 = scmp.ne.s32.totalorder %s68, %s71
      %p77 = scmp.eq.s32.totalorder %s11, 0
      %p78 = por %p76, %p77
      %p79 = scmp.ne.s32.totalorder %s68, %s71
      %p80 = scmp.eq.s32.totalorder %s16, 1
      %p81 = por %p79, %p80
      %p82 = scmp.ne.s32.totalorder %s71, %s72
      %p83 = scmp.eq.s32.totalorder %s16, 0
      %p84 = por %p82, %p83
      %p85 = scmp.ne.s32.totalorder %s71, %s72
      %p86 = scmp.eq.s32.totalorder %s17, 1
      %p87 = por %p85, %p86
      %p89 = scmp.ne.s32.totalorder %s72, %s88
      %p90 = scmp.eq.s32.totalorder %s17, 0
      %p91 = por %p89, %p90
      %p92 = scmp.le.s32.totalorder 1, %s11
      %p93 = scmp.lt.s32.totalorder %s11, 3
      %p94 = pnand %p92, %p93
      %p95 = pneg %p94
      // Predicated region
      $region9: #{stem_fwd.1} parent=5 // pred_check
        _
      $region10: #{stem_fwd.1} parent=5 // pred_check_branch
        %97 = sbr.rel (%p94) target = $region12
      $region11: #{stem_fwd.1} parent=5 // pred_region
        %s98 = ssub.s32 %s11, 1
        // Predicated region
        $region13: #{stem_fwd.1} parent=11 // pred_check
          %p99 = pneg %p58
        $region14: #{stem_fwd.1} parent=11 // pred_check_branch
          %101 = sbr.rel (%p99) target = $region16
        $region15: #{stem_fwd.1} parent=11 // pred_region
          _
        $region16: #{stem_fwd.1} parent=11 // pred_fallthru
          _
      $region12: #{stem_fwd.1} parent=5 // pred_fallthru
        _
      %p102 = scmp.lt.s32.totalorder %s11, 2
      // Predicated region
      $region17: #{stem_fwd.1} parent=5 // pred_check
        %p103 = pneg %p102
      $region18: #{stem_fwd.1} parent=5 // pred_check_branch
        %105 = sbr.rel (%p103) target = $region20
      $region19: #{stem_fwd.1} parent=5 // pred_region
        // Predicated region
        $region21: #{stem_fwd.1} parent=19 // pred_check
          %p106 = pneg %p31
        $region22: #{stem_fwd.1} parent=19 // pred_check_branch
          %108 = sbr.rel (%p106) target = $region24
        $region23: #{stem_fwd.1} parent=19 // pred_region
          %p109 = scmp.lt.s32.totalorder %s11, 1
          %s110 = scalar_select %p109, %s11, 1
          %s111 = smul.addr %s110, 256
          %s112 = smul.addr %s111, 4
          %s113 = scalar_lea.vmem %s0, %s112
        $region24: #{stem_fwd.1} parent=19 // pred_fallthru
          _
      $region20: #{stem_fwd.1} parent=5 // pred_fallthru
        _
      %p114 = scmp.le.s32.totalorder 1, %s11
      %p115 = scmp.lt.s32.totalorder %s11, 3
      %p116 = pnand %p114, %p115
      %p117 = pneg %p116
      // Predicated region
      $region25: #{stem_fwd.1} parent=5 // pred_check
        _
      $region26: #{stem_fwd.1} parent=5 // pred_check_branch
        %119 = sbr.rel (%p116) target = $region28
      $region27: #{stem_fwd.1} parent=5 // pred_region
        %s120 = ssub.s32 %s11, 1
        %p121 = scmp.lt.s32.totalorder %s16, 1
        %s122 = scalar_select %p121, %s16, 1
        %s123 = smul.addr %s122, 256
        %s124 = smul.addr %s123, 4
        %s125 = scalar_lea.vmem %s0, %s124
        %p126 = pneg %p37
        %p127 = pneg %p34
        %p128 = pneg %p58
        %p129 = pneg %p55
        %p130 = pneg %p84
        %p131 = pneg %p81
        %s132 = sand.u32 %s71, 1
        %s133 = scalar_lea.sflag [#allocation3], %s132
        %s134 = sand.u32 %s71, 1
        %s135 = smul.addr %s134, 1024
        %s136 = scalar_lea.vmem [#allocation2], %s135
        %p137 = scmp.lt.s32.totalorder %s16, 1
        %s138 = scalar_select %p137, %s16, 1
        %s139 = smul.addr %s138, 256
        %s140 = smul.addr %s139, 4
        %s141 = scalar_lea.vmem %s0, %s140
        %v143 = vld [vmem:[%s141] sm:$0xff]
        %v144 = vld [vmem:[%s141 + $0x8] sm:$0xff]
        %v145 = vld [vmem:[%s141 + $0x10] sm:$0xff]
        %v146 = vld [vmem:[%s141 + $0x18] sm:$0xff]
        %v147 = vld [vmem:[%s141 + $0x20] sm:$0xff]
        %v148 = vld [vmem:[%s141 + $0x28] sm:$0xff]
        %v149 = vld [vmem:[%s141 + $0x30] sm:$0xff]
        %v150 = vld [vmem:[%s141 + $0x38] sm:$0xff]
        %v151 = vld [vmem:[%s141 + $0x40] sm:$0xff]
        %v152 = vld [vmem:[%s141 + $0x48] sm:$0xff]
        %v153 = vld [vmem:[%s141 + $0x50] sm:$0xff]
        %v154 = vld [vmem:[%s141 + $0x58] sm:$0xff]
        %v155 = vld [vmem:[%s141 + $0x60] sm:$0xff]
        %v156 = vld [vmem:[%s141 + $0x68] sm:$0xff]
        %v157 = vld [vmem:[%s141 + $0x70] sm:$0xff]
        %v158 = vld [vmem:[%s141 + $0x78] sm:$0xff]
        %v159 = vld [vmem:[%s141 + $0x80] sm:$0xff]
        %v160 = vld [vmem:[%s141 + $0x88] sm:$0xff]
        %v161 = vld [vmem:[%s141 + $0x90] sm:$0xff]
        %v162 = vld [vmem:[%s141 + $0x98] sm:$0xff]
        %v163 = vld [vmem:[%s141 + $0xa0] sm:$0xff]
        %v164 = vld [vmem:[%s141 + $0xa8] sm:$0xff]
        %v165 = vld [vmem:[%s141 + $0xb0] sm:$0xff]
        %v166 = vld [vmem:[%s141 + $0xb8] sm:$0xff]
        %v167 = vld [vmem:[%s141 + $0xc0] sm:$0xff]
        %v168 = vld [vmem:[%s141 + $0xc8] sm:$0xff]
        %v169 = vld [vmem:[%s141 + $0xd0] sm:$0xff]
        %v170 = vld [vmem:[%s141 + $0xd8] sm:$0xff]
        %v171 = vld [vmem:[%s141 + $0xe0] sm:$0xff]
        %v172 = vld [vmem:[%s141 + $0xe8] sm:$0xff]
        %v173 = vld [vmem:[%s141 + $0xf0] sm:$0xff]
        %v174 = vld [vmem:[%s141 + $0xf8] sm:$0xff]
        %v175 = vld [vmem:[%s141 + $0x100] sm:$0xff]
        %v176 = vld [vmem:[%s141 + $0x108] sm:$0xff]
        %v177 = vld [vmem:[%s141 + $0x110] sm:$0xff]
        %v178 = vld [vmem:[%s141 + $0x118] sm:$0xff]
        %v179 = vld [vmem:[%s141 + $0x120] sm:$0xff]
        %v180 = vld [vmem:[%s141 + $0x128] sm:$0xff]
        %v181 = vld [vmem:[%s141 + $0x130] sm:$0xff]
        %v182 = vld [vmem:[%s141 + $0x138] sm:$0xff]
        %v183 = vld [vmem:[%s141 + $0x140] sm:$0xff]
        %v184 = vld [vmem:[%s141 + $0x148] sm:$0xff]
        %v185 = vld [vmem:[%s141 + $0x150] sm:$0xff]
        %v186 = vld [vmem:[%s141 + $0x158] sm:$0xff]
        %v187 = vld [vmem:[%s141 + $0x160] sm:$0xff]
        %v188 = vld [vmem:[%s141 + $0x168] sm:$0xff]
        %v189 = vld [vmem:[%s141 + $0x170] sm:$0xff]
        %v190 = vld [vmem:[%s141 + $0x178] sm:$0xff]
        %v191 = vld [vmem:[%s141 + $0x180] sm:$0xff]
        %v192 = vld [vmem:[%s141 + $0x188] sm:$0xff]
        %v193 = vld [vmem:[%s141 + $0x190] sm:$0xff]
        %v194 = vld [vmem:[%s141 + $0x198] sm:$0xff]
        %v195 = vld [vmem:[%s141 + $0x1a0] sm:$0xff]
        %v196 = vld [vmem:[%s141 + $0x1a8] sm:$0xff]
        %v197 = vld [vmem:[%s141 + $0x1b0] sm:$0xff]
        %v198 = vld [vmem:[%s141 + $0x1b8] sm:$0xff]
        %v199 = vld [vmem:[%s141 + $0x1c0] sm:$0xff]
        %v200 = vld [vmem:[%s141 + $0x1c8] sm:$0xff]
        %v201 = vld [vmem:[%s141 + $0x1d0] sm:$0xff]
        %v202 = vld [vmem:[%s141 + $0x1d8] sm:$0xff]
        %v203 = vld [vmem:[%s141 + $0x1e0] sm:$0xff]
        %v204 = vld [vmem:[%s141 + $0x1e8] sm:$0xff]
        %v205 = vld [vmem:[%s141 + $0x1f0] sm:$0xff]
        %v206 = vld [vmem:[%s141 + $0x1f8] sm:$0xff]
        %v207 = vld [vmem:[%s141 + $0x200] sm:$0xff]
        %v208 = vld [vmem:[%s141 + $0x208] sm:$0xff]
        %v209 = vld [vmem:[%s141 + $0x210] sm:$0xff]
        %v210 = vld [vmem:[%s141 + $0x218] sm:$0xff]
        %v211 = vld [vmem:[%s141 + $0x220] sm:$0xff]
        %v212 = vld [vmem:[%s141 + $0x228] sm:$0xff]
        %v213 = vld [vmem:[%s141 + $0x230] sm:$0xff]
        %v214 = vld [vmem:[%s141 + $0x238] sm:$0xff]
        %v215 = vld [vmem:[%s141 + $0x240] sm:$0xff]
        %v216 = vld [vmem:[%s141 + $0x248] sm:$0xff]
        %v217 = vld [vmem:[%s141 + $0x250] sm:$0xff]
        %v218 = vld [vmem:[%s141 + $0x258] sm:$0xff]
        %v219 = vld [vmem:[%s141 + $0x260] sm:$0xff]
        %v220 = vld [vmem:[%s141 + $0x268] sm:$0xff]
        %v221 = vld [vmem:[%s141 + $0x270] sm:$0xff]
        %v222 = vld [vmem:[%s141 + $0x278] sm:$0xff]
        %v223 = vld [vmem:[%s141 + $0x280] sm:$0xff]
        %v224 = vld [vmem:[%s141 + $0x288] sm:$0xff]
        %v225 = vld [vmem:[%s141 + $0x290] sm:$0xff]
        %v226 = vld [vmem:[%s141 + $0x298] sm:$0xff]
        %v227 = vld [vmem:[%s141 + $0x2a0] sm:$0xff]
        %v228 = vld [vmem:[%s141 + $0x2a8] sm:$0xff]
        %v229 = vld [vmem:[%s141 + $0x2b0] sm:$0xff]
        %v230 = vld [vmem:[%s141 + $0x2b8] sm:$0xff]
        %v231 = vld [vmem:[%s141 + $0x2c0] sm:$0xff]
        %v232 = vld [vmem:[%s141 + $0x2c8] sm:$0xff]
        %v233 = vld [vmem:[%s141 + $0x2d0] sm:$0xff]
        %v234 = vld [vmem:[%s141 + $0x2d8] sm:$0xff]
        %v235 = vld [vmem:[%s141 + $0x2e0] sm:$0xff]
        %v236 = vld [vmem:[%s141 + $0x2e8] sm:$0xff]
        %v237 = vld [vmem:[%s141 + $0x2f0] sm:$0xff]
        %v238 = vld [vmem:[%s141 + $0x2f8] sm:$0xff]
        %v239 = vld [vmem:[%s141 + $0x300] sm:$0xff]
        %v240 = vld [vmem:[%s141 + $0x308] sm:$0xff]
        %v241 = vld [vmem:[%s141 + $0x310] sm:$0xff]
        %v242 = vld [vmem:[%s141 + $0x318] sm:$0xff]
        %v243 = vld [vmem:[%s141 + $0x320] sm:$0xff]
        %v244 = vld [vmem:[%s141 + $0x328] sm:$0xff]
        %v245 = vld [vmem:[%s141 + $0x330] sm:$0xff]
        %v246 = vld [vmem:[%s141 + $0x338] sm:$0xff]
        %v247 = vld [vmem:[%s141 + $0x340] sm:$0xff]
        %v248 = vld [vmem:[%s141 + $0x348] sm:$0xff]
        %v249 = vld [vmem:[%s141 + $0x350] sm:$0xff]
        %v250 = vld [vmem:[%s141 + $0x358] sm:$0xff]
        %v251 = vld [vmem:[%s141 + $0x360] sm:$0xff]
        %v252 = vld [vmem:[%s141 + $0x368] sm:$0xff]
        %v253 = vld [vmem:[%s141 + $0x370] sm:$0xff]
        %v254 = vld [vmem:[%s141 + $0x378] sm:$0xff]
        %v255 = vld [vmem:[%s141 + $0x380] sm:$0xff]
        %v256 = vld [vmem:[%s141 + $0x388] sm:$0xff]
        %v257 = vld [vmem:[%s141 + $0x390] sm:$0xff]
        %v258 = vld [vmem:[%s141 + $0x398] sm:$0xff]
        %v259 = vld [vmem:[%s141 + $0x3a0] sm:$0xff]
        %v260 = vld [vmem:[%s141 + $0x3a8] sm:$0xff]
        %v261 = vld [vmem:[%s141 + $0x3b0] sm:$0xff]
        %v262 = vld [vmem:[%s141 + $0x3b8] sm:$0xff]
        %v263 = vld [vmem:[%s141 + $0x3c0] sm:$0xff]
        %v264 = vld [vmem:[%s141 + $0x3c8] sm:$0xff]
        %v265 = vld [vmem:[%s141 + $0x3d0] sm:$0xff]
        %v266 = vld [vmem:[%s141 + $0x3d8] sm:$0xff]
        %v267 = vld [vmem:[%s141 + $0x3e0] sm:$0xff]
        %v268 = vld [vmem:[%s141 + $0x3e8] sm:$0xff]
        %v269 = vld [vmem:[%s141 + $0x3f0] sm:$0xff]
        %v270 = vld [vmem:[%s141 + $0x3f8] sm:$0xff]
        %v271 = vld [vmem:[%s1] sm:$0xf]
        %v272 = vld [vmem:[%s1 + $0x4] sm:$0xf]
        %v273 = vld [vmem:[%s1 + $0x8] sm:$0xf]
        %v274 = vld [vmem:[%s1 + $0xc] sm:$0xf]
        %v275 = vld [vmem:[%s1 + $0x10] sm:$0xf]
        %v276 = vld [vmem:[%s1 + $0x14] sm:$0xf]
        %v277 = vld [vmem:[%s1 + $0x18] sm:$0xf]
        %v278 = vld [vmem:[%s1 + $0x1c] sm:$0xf]
        %v279 = vld [vmem:[%s1 + $0x20] sm:$0xf]
        %v280 = vld [vmem:[%s1 + $0x24] sm:$0xf]
        %v281 = vld [vmem:[%s1 + $0x28] sm:$0xf]
        %v282 = vld [vmem:[%s1 + $0x2c] sm:$0xf]
        %v283 = vld [vmem:[%s1 + $0x30] sm:$0xf]
        %v284 = vld [vmem:[%s1 + $0x34] sm:$0xf]
        %v285 = vld [vmem:[%s1 + $0x38] sm:$0xf]
        %v286 = vld [vmem:[%s1 + $0x3c] sm:$0xf]
        %v287 = vld [vmem:[%s1 + $0x40] sm:$0xf]
        %v288 = vld [vmem:[%s1 + $0x44] sm:$0xf]
        %v289 = vld [vmem:[%s1 + $0x48] sm:$0x3]
        %v418 = vunpack.c.l.b16 %v143
        %v419 = vunpack.c.h.b16 %v143
        %v420 = vunpack.c.l.b16 %v144
        %v421 = vunpack.c.h.b16 %v144
        %v422 = vunpack.c.l.b16 %v145
        %v423 = vunpack.c.h.b16 %v145
        %v424 = vunpack.c.l.b16 %v146
        %v425 = vunpack.c.h.b16 %v146
        %v426 = vunpack.c.l.b16 %v147
        %v427 = vunpack.c.h.b16 %v147
        %v428 = vunpack.c.l.b16 %v148
        %v429 = vunpack.c.h.b16 %v148
        %v430 = vunpack.c.l.b16 %v149
        %v431 = vunpack.c.h.b16 %v149
        %v432 = vunpack.c.l.b16 %v150
        %v433 = vunpack.c.h.b16 %v150
        %v434 = vunpack.c.l.b16 %v151
        %v435 = vunpack.c.h.b16 %v151
        %v436 = vunpack.c.l.b16 %v152
        %v437 = vunpack.c.h.b16 %v152
        %v438 = vunpack.c.l.b16 %v153
        %v439 = vunpack.c.h.b16 %v153
        %v440 = vunpack.c.l.b16 %v154
        %v441 = vunpack.c.h.b16 %v154
        %v442 = vunpack.c.l.b16 %v155
        %v443 = vunpack.c.h.b16 %v155
        %v444 = vunpack.c.l.b16 %v156
        %v445 = vunpack.c.h.b16 %v156
        %v446 = vunpack.c.l.b16 %v157
        %v447 = vunpack.c.h.b16 %v157
        %v448 = vunpack.c.l.b16 %v158
        %v449 = vunpack.c.h.b16 %v158
        %v450 = vunpack.c.l.b16 %v159
        %v451 = vunpack.c.h.b16 %v159
        %v452 = vunpack.c.l.b16 %v160
        %v453 = vunpack.c.h.b16 %v160
        %v454 = vunpack.c.l.b16 %v161
        %v455 = vunpack.c.h.b16 %v161
        %v456 = vunpack.c.l.b16 %v162
        %v457 = vunpack.c.h.b16 %v162
        %v458 = vunpack.c.l.b16 %v163
        %v459 = vunpack.c.h.b16 %v163
        %v460 = vunpack.c.l.b16 %v164
        %v461 = vunpack.c.h.b16 %v164
        %v462 = vunpack.c.l.b16 %v165
        %v463 = vunpack.c.h.b16 %v165
        %v464 = vunpack.c.l.b16 %v166
        %v465 = vunpack.c.h.b16 %v166
        %v466 = vunpack.c.l.b16 %v167
        %v467 = vunpack.c.h.b16 %v167
        %v468 = vunpack.c.l.b16 %v168
        %v469 = vunpack.c.h.b16 %v168
        %v470 = vunpack.c.l.b16 %v169
        %v471 = vunpack.c.h.b16 %v169
        %v472 = vunpack.c.l.b16 %v170
        %v473 = vunpack.c.h.b16 %v170
        %v474 = vunpack.c.l.b16 %v171
        %v475 = vunpack.c.h.b16 %v171
        %v476 = vunpack.c.l.b16 %v172
        %v477 = vunpack.c.h.b16 %v172
        %v478 = vunpack.c.l.b16 %v173
        %v479 = vunpack.c.h.b16 %v173
        %v480 = vunpack.c.l.b16 %v174
        %v481 = vunpack.c.h.b16 %v174
        %v482 = vunpack.c.l.b16 %v175
        %v483 = vunpack.c.h.b16 %v175
        %v484 = vunpack.c.l.b16 %v176
        %v485 = vunpack.c.h.b16 %v176
        %v486 = vunpack.c.l.b16 %v177
        %v487 = vunpack.c.h.b16 %v177
        %v488 = vunpack.c.l.b16 %v178
        %v489 = vunpack.c.h.b16 %v178
        %v490 = vunpack.c.l.b16 %v179
        %v491 = vunpack.c.h.b16 %v179
        %v492 = vunpack.c.l.b16 %v180
        %v493 = vunpack.c.h.b16 %v180
        %v494 = vunpack.c.l.b16 %v181
        %v495 = vunpack.c.h.b16 %v181
        %v496 = vunpack.c.l.b16 %v182
        %v497 = vunpack.c.h.b16 %v182
        %v498 = vunpack.c.l.b16 %v183
        %v499 = vunpack.c.h.b16 %v183
        %v500 = vunpack.c.l.b16 %v184
        %v501 = vunpack.c.h.b16 %v184
        %v502 = vunpack.c.l.b16 %v185
        %v503 = vunpack.c.h.b16 %v185
        %v504 = vunpack.c.l.b16 %v186
        %v505 = vunpack.c.h.b16 %v186
        %v506 = vunpack.c.l.b16 %v187
        %v507 = vunpack.c.h.b16 %v187
        %v508 = vunpack.c.l.b16 %v188
        %v509 = vunpack.c.h.b16 %v188
        %v510 = vunpack.c.l.b16 %v189
        %v511 = vunpack.c.h.b16 %v189
        %v512 = vunpack.c.l.b16 %v190
        %v513 = vunpack.c.h.b16 %v190
        %v514 = vunpack.c.l.b16 %v191
        %v515 = vunpack.c.h.b16 %v191
        %v516 = vunpack.c.l.b16 %v192
        %v517 = vunpack.c.h.b16 %v192
        %v518 = vunpack.c.l.b16 %v193
        %v519 = vunpack.c.h.b16 %v193
        %v520 = vunpack.c.l.b16 %v194
        %v521 = vunpack.c.h.b16 %v194
        %v522 = vunpack.c.l.b16 %v195
        %v523 = vunpack.c.h.b16 %v195
        %v524 = vunpack.c.l.b16 %v196
        %v525 = vunpack.c.h.b16 %v196
        %v526 = vunpack.c.l.b16 %v197
        %v527 = vunpack.c.h.b16 %v197
        %v528 = vunpack.c.l.b16 %v198
        %v529 = vunpack.c.h.b16 %v198
        %v530 = vunpack.c.l.b16 %v199
        %v531 = vunpack.c.h.b16 %v199
        %v532 = vunpack.c.l.b16 %v200
        %v533 = vunpack.c.h.b16 %v200
        %v534 = vunpack.c.l.b16 %v201
        %v535 = vunpack.c.h.b16 %v201
        %v536 = vunpack.c.l.b16 %v202
        %v537 = vunpack.c.h.b16 %v202
        %v538 = vunpack.c.l.b16 %v203
        %v539 = vunpack.c.h.b16 %v203
        %v540 = vunpack.c.l.b16 %v204
        %v541 = vunpack.c.h.b16 %v204
        %v542 = vunpack.c.l.b16 %v205
        %v543 = vunpack.c.h.b16 %v205
        %v544 = vunpack.c.l.b16 %v206
        %v545 = vunpack.c.h.b16 %v206
        %v546 = vunpack.c.l.b16 %v207
        %v547 = vunpack.c.h.b16 %v207
        %v548 = vunpack.c.l.b16 %v208
        %v549 = vunpack.c.h.b16 %v208
        %v550 = vunpack.c.l.b16 %v209
        %v551 = vunpack.c.h.b16 %v209
        %v552 = vunpack.c.l.b16 %v210
        %v553 = vunpack.c.h.b16 %v210
        %v554 = vunpack.c.l.b16 %v211
        %v555 = vunpack.c.h.b16 %v211
        %v556 = vunpack.c.l.b16 %v212
        %v557 = vunpack.c.h.b16 %v212
        %v558 = vunpack.c.l.b16 %v213
        %v559 = vunpack.c.h.b16 %v213
        %v560 = vunpack.c.l.b16 %v214
        %v561 = vunpack.c.h.b16 %v214
        %v562 = vunpack.c.l.b16 %v215
        %v563 = vunpack.c.h.b16 %v215
        %v564 = vunpack.c.l.b16 %v216
        %v565 = vunpack.c.h.b16 %v216
        %v566 = vunpack.c.l.b16 %v217
        %v567 = vunpack.c.h.b16 %v217
        %v568 = vunpack.c.l.b16 %v218
        %v569 = vunpack.c.h.b16 %v218
        %v570 = vunpack.c.l.b16 %v219
        %v571 = vunpack.c.h.b16 %v219
        %v572 = vunpack.c.l.b16 %v220
        %v573 = vunpack.c.h.b16 %v220
        %v574 = vunpack.c.l.b16 %v221
        %v575 = vunpack.c.h.b16 %v221
        %v576 = vunpack.c.l.b16 %v222
        %v577 = vunpack.c.h.b16 %v222
        %v578 = vunpack.c.l.b16 %v223
        %v579 = vunpack.c.h.b16 %v223
        %v580 = vunpack.c.l.b16 %v224
        %v581 = vunpack.c.h.b16 %v224
        %v582 = vunpack.c.l.b16 %v225
        %v583 = vunpack.c.h.b16 %v225
        %v584 = vunpack.c.l.b16 %v226
        %v585 = vunpack.c.h.b16 %v226
        %v586 = vunpack.c.l.b16 %v227
        %v587 = vunpack.c.h.b16 %v227
        %v588 = vunpack.c.l.b16 %v228
        %v589 = vunpack.c.h.b16 %v228
        %v590 = vunpack.c.l.b16 %v229
        %v591 = vunpack.c.h.b16 %v229
        %v592 = vunpack.c.l.b16 %v230
        %v593 = vunpack.c.h.b16 %v230
        %v594 = vunpack.c.l.b16 %v231
        %v595 = vunpack.c.h.b16 %v231
        %v596 = vunpack.c.l.b16 %v232
        %v597 = vunpack.c.h.b16 %v232
        %v598 = vunpack.c.l.b16 %v233
        %v599 = vunpack.c.h.b16 %v233
        %v600 = vunpack.c.l.b16 %v234
        %v601 = vunpack.c.h.b16 %v234
        %v602 = vunpack.c.l.b16 %v235
        %v603 = vunpack.c.h.b16 %v235
        %v604 = vunpack.c.l.b16 %v236
        %v605 = vunpack.c.h.b16 %v236
        %v606 = vunpack.c.l.b16 %v237
        %v607 = vunpack.c.h.b16 %v237
        %v608 = vunpack.c.l.b16 %v238
        %v609 = vunpack.c.h.b16 %v238
        %v610 = vunpack.c.l.b16 %v239
        %v611 = vunpack.c.h.b16 %v239
        %v612 = vunpack.c.l.b16 %v240
        %v613 = vunpack.c.h.b16 %v240
        %v614 = vunpack.c.l.b16 %v241
        %v615 = vunpack.c.h.b16 %v241
        %v616 = vunpack.c.l.b16 %v242
        %v617 = vunpack.c.h.b16 %v242
        %v618 = vunpack.c.l.b16 %v243
        %v619 = vunpack.c.h.b16 %v243
        %v620 = vunpack.c.l.b16 %v244
        %v621 = vunpack.c.h.b16 %v244
        %v622 = vunpack.c.l.b16 %v245
        %v623 = vunpack.c.h.b16 %v245
        %v624 = vunpack.c.l.b16 %v246
        %v625 = vunpack.c.h.b16 %v246
        %v626 = vunpack.c.l.b16 %v247
        %v627 = vunpack.c.h.b16 %v247
        %v628 = vunpack.c.l.b16 %v248
        %v629 = vunpack.c.h.b16 %v248
        %v630 = vunpack.c.l.b16 %v249
        %v631 = vunpack.c.h.b16 %v249
        %v632 = vunpack.c.l.b16 %v250
        %v633 = vunpack.c.h.b16 %v250
        %v634 = vunpack.c.l.b16 %v251
        %v635 = vunpack.c.h.b16 %v251
        %v636 = vunpack.c.l.b16 %v252
        %v637 = vunpack.c.h.b16 %v252
        %v638 = vunpack.c.l.b16 %v253
        %v639 = vunpack.c.h.b16 %v253
        %v640 = vunpack.c.l.b16 %v254
        %v641 = vunpack.c.h.b16 %v254
        %v642 = vunpack.c.l.b16 %v255
        %v643 = vunpack.c.h.b16 %v255
        %v644 = vunpack.c.l.b16 %v256
        %v645 = vunpack.c.h.b16 %v256
        %v646 = vunpack.c.l.b16 %v257
        %v647 = vunpack.c.h.b16 %v257
        %v648 = vunpack.c.l.b16 %v258
        %v649 = vunpack.c.h.b16 %v258
        %v650 = vunpack.c.l.b16 %v259
        %v651 = vunpack.c.h.b16 %v259
        %v652 = vunpack.c.l.b16 %v260
        %v653 = vunpack.c.h.b16 %v260
        %v654 = vunpack.c.l.b16 %v261
        %v655 = vunpack.c.h.b16 %v261
        %v656 = vunpack.c.l.b16 %v262
        %v657 = vunpack.c.h.b16 %v262
        %v658 = vunpack.c.l.b16 %v263
        %v659 = vunpack.c.h.b16 %v263
        %v660 = vunpack.c.l.b16 %v264
        %v661 = vunpack.c.h.b16 %v264
        %v662 = vunpack.c.l.b16 %v265
        %v663 = vunpack.c.h.b16 %v265
        %v664 = vunpack.c.l.b16 %v266
        %v665 = vunpack.c.h.b16 %v266
        %v666 = vunpack.c.l.b16 %v267
        %v667 = vunpack.c.h.b16 %v267
        %v668 = vunpack.c.l.b16 %v268
        %v669 = vunpack.c.h.b16 %v268
        %v670 = vunpack.c.l.b16 %v269
        %v671 = vunpack.c.h.b16 %v269
        %v672 = vunpack.c.l.b16 %v270
        %v673 = vunpack.c.h.b16 %v270
        %v674 = vpack.c.b16 %v420, %v418
        %v675 = vpack.c.b16 %v421, %v419
        %v676 = vpack.c.b16 %v424, %v422
        %v677 = vpack.c.b16 %v425, %v423
        %v678 = vpack.c.b16 %v428, %v426
        %v679 = vpack.c.b16 %v429, %v427
        %v680 = vpack.c.b16 %v432, %v430
        %v681 = vpack.c.b16 %v433, %v431
        %v682 = vpack.c.b16 %v436, %v434
        %v683 = vpack.c.b16 %v437, %v435
        %v684 = vpack.c.b16 %v440, %v438
        %v685 = vpack.c.b16 %v441, %v439
        %v686 = vpack.c.b16 %v444, %v442
        %v687 = vpack.c.b16 %v445, %v443
        %v688 = vpack.c.b16 %v448, %v446
        %v689 = vpack.c.b16 %v449, %v447
        %v690 = vpack.c.b16 %v452, %v450
        %v691 = vpack.c.b16 %v453, %v451
        %v692 = vpack.c.b16 %v456, %v454
        %v693 = vpack.c.b16 %v457, %v455
        %v694 = vpack.c.b16 %v460, %v458
        %v695 = vpack.c.b16 %v461, %v459
        %v696 = vpack.c.b16 %v464, %v462
        %v697 = vpack.c.b16 %v465, %v463
        %v698 = vpack.c.b16 %v468, %v466
        %v699 = vpack.c.b16 %v469, %v467
        %v700 = vpack.c.b16 %v472, %v470
        %v701 = vpack.c.b16 %v473, %v471
        %v702 = vpack.c.b16 %v476, %v474
        %v703 = vpack.c.b16 %v477, %v475
        %v704 = vpack.c.b16 %v480, %v478
        %v705 = vpack.c.b16 %v481, %v479
        %v706 = vpack.c.b16 %v484, %v482
        %v707 = vpack.c.b16 %v485, %v483
        %v708 = vpack.c.b16 %v488, %v486
        %v709 = vpack.c.b16 %v489, %v487
        %v710 = vpack.c.b16 %v492, %v490
        %v711 = vpack.c.b16 %v493, %v491
        %v712 = vpack.c.b16 %v496, %v494
        %v713 = vpack.c.b16 %v497, %v495
        %v714 = vpack.c.b16 %v500, %v498
        %v715 = vpack.c.b16 %v501, %v499
        %v716 = vpack.c.b16 %v504, %v502
        %v717 = vpack.c.b16 %v505, %v503
        %v718 = vpack.c.b16 %v508, %v506
        %v719 = vpack.c.b16 %v509, %v507
        %v720 = vpack.c.b16 %v512, %v510
        %v721 = vpack.c.b16 %v513, %v511
        %v722 = vpack.c.b16 %v516, %v514
        %v723 = vpack.c.b16 %v517, %v515
        %v724 = vpack.c.b16 %v520, %v518
        %v725 = vpack.c.b16 %v521, %v519
        %v726 = vpack.c.b16 %v524, %v522
        %v727 = vpack.c.b16 %v525, %v523
        %v728 = vpack.c.b16 %v528, %v526
        %v729 = vpack.c.b16 %v529, %v527
        %v730 = vpack.c.b16 %v532, %v530
        %v731 = vpack.c.b16 %v533, %v531
        %v732 = vpack.c.b16 %v536, %v534
        %v733 = vpack.c.b16 %v537, %v535
        %v734 = vpack.c.b16 %v540, %v538
        %v735 = vpack.c.b16 %v541, %v539
        %v736 = vpack.c.b16 %v544, %v542
        %v737 = vpack.c.b16 %v545, %v543
        %v738 = vpack.c.b16 %v548, %v546
        %v739 = vpack.c.b16 %v549, %v547
        %v740 = vpack.c.b16 %v552, %v550
        %v741 = vpack.c.b16 %v553, %v551
        %v742 = vpack.c.b16 %v556, %v554
        %v743 = vpack.c.b16 %v557, %v555
        %v744 = vpack.c.b16 %v560, %v558
        %v745 = vpack.c.b16 %v561, %v559
        %v746 = vpack.c.b16 %v564, %v562
        %v747 = vpack.c.b16 %v565, %v563
        %v748 = vpack.c.b16 %v568, %v566
        %v749 = vpack.c.b16 %v569, %v567
        %v750 = vpack.c.b16 %v572, %v570
        %v751 = vpack.c.b16 %v573, %v571
        %v752 = vpack.c.b16 %v576, %v574
        %v753 = vpack.c.b16 %v577, %v575
        %v754 = vpack.c.b16 %v580, %v578
        %v755 = vpack.c.b16 %v581, %v579
        %v756 = vpack.c.b16 %v584, %v582
        %v757 = vpack.c.b16 %v585, %v583
        %v758 = vpack.c.b16 %v588, %v586
        %v759 = vpack.c.b16 %v589, %v587
        %v760 = vpack.c.b16 %v592, %v590
        %v761 = vpack.c.b16 %v593, %v591
        %v762 = vpack.c.b16 %v596, %v594
        %v763 = vpack.c.b16 %v597, %v595
        %v764 = vpack.c.b16 %v600, %v598
        %v765 = vpack.c.b16 %v601, %v599
        %v766 = vpack.c.b16 %v604, %v602
        %v767 = vpack.c.b16 %v605, %v603
        %v768 = vpack.c.b16 %v608, %v606
        %v769 = vpack.c.b16 %v609, %v607
        %v770 = vpack.c.b16 %v612, %v610
        %v771 = vpack.c.b16 %v613, %v611
        %v772 = vpack.c.b16 %v616, %v614
        %v773 = vpack.c.b16 %v617, %v615
        %v774 = vpack.c.b16 %v620, %v618
        %v775 = vpack.c.b16 %v621, %v619
        %v776 = vpack.c.b16 %v624, %v622
        %v777 = vpack.c.b16 %v625, %v623
        %v778 = vpack.c.b16 %v628, %v626
        %v779 = vpack.c.b16 %v629, %v627
        %v780 = vpack.c.b16 %v632, %v630
        %v781 = vpack.c.b16 %v633, %v631
        %v782 = vpack.c.b16 %v636, %v634
        %v783 = vpack.c.b16 %v637, %v635
        %v784 = vpack.c.b16 %v640, %v638
        %v785 = vpack.c.b16 %v641, %v639
        %v786 = vpack.c.b16 %v644, %v642
        %v787 = vpack.c.b16 %v645, %v643
        %v788 = vpack.c.b16 %v648, %v646
        %v789 = vpack.c.b16 %v649, %v647
        %v790 = vpack.c.b16 %v652, %v650
        %v791 = vpack.c.b16 %v653, %v651
        %v792 = vpack.c.b16 %v656, %v654
        %v793 = vpack.c.b16 %v657, %v655
        %v794 = vpack.c.b16 %v660, %v658
        %v795 = vpack.c.b16 %v661, %v659
        %v796 = vpack.c.b16 %v664, %v662
        %v797 = vpack.c.b16 %v665, %v663
        %v798 = vpack.c.b16 %v668, %v666
        %v799 = vpack.c.b16 %v669, %v667
        %v800 = vpack.c.b16 %v672, %v670
        %v801 = vpack.c.b16 %v673, %v671
        %v885 = vunpack.c.l.b16 %v271
        %v886 = vunpack.c.l.b16 %v272
        %v887 = vunpack.c.l.b16 %v273
        %v888 = vunpack.c.l.b16 %v274
        %v889 = vunpack.c.l.b16 %v275
        %v890 = vunpack.c.l.b16 %v276
        %v891 = vunpack.c.l.b16 %v277
        %v892 = vunpack.c.l.b16 %v278
        %v893 = vunpack.c.l.b16 %v279
        %v894 = vunpack.c.l.b16 %v280
        %v895 = vunpack.c.l.b16 %v281
        %v896 = vunpack.c.l.b16 %v282
        %v897 = vunpack.c.l.b16 %v283
        %v898 = vunpack.c.l.b16 %v284
        %v899 = vunpack.c.l.b16 %v285
        %v900 = vunpack.c.l.b16 %v286
        %v901 = vunpack.c.l.b16 %v287
        %v902 = vunpack.c.l.b16 %v288
        %v903 = vunpack.c.l.b16 %v289
        %v904 = vpack.c.b16 %v886, %v885
        %v905 = vpack.c.b16 %v888, %v887
        %v906 = vpack.c.b16 %v890, %v889
        %v907 = vpack.c.b16 %v892, %v891
        %v908 = vpack.c.b16 %v894, %v893
        %v909 = vpack.c.b16 %v896, %v895
        %v910 = vpack.c.b16 %v898, %v897
        %v911 = vpack.c.b16 %v900, %v899
        %v912 = vpack.c.b16 %v902, %v901
        %v913 = vpack.c.b16 %v903, %v903
        %vm923 = vcmask 154624
        %v925 = vsel %vm923, %v675, 0
        %v928 = vsel %vm923, %v677, 0
        %v931 = vsel %vm923, %v679, 0
        %v934 = vsel %vm923, %v681, 0
        %v937 = vsel %vm923, %v683, 0
        %v940 = vsel %vm923, %v685, 0
        %v943 = vsel %vm923, %v687, 0
        %v946 = vsel %vm923, %v689, 0
        %v949 = vsel %vm923, %v691, 0
        %v952 = vsel %vm923, %v693, 0
        %v955 = vsel %vm923, %v695, 0
        %v958 = vsel %vm923, %v697, 0
        %v961 = vsel %vm923, %v699, 0
        %v964 = vsel %vm923, %v701, 0
        %v967 = vsel %vm923, %v703, 0
        %v970 = vsel %vm923, %v705, 0
        %v973 = vsel %vm923, %v707, 0
        %v976 = vsel %vm923, %v709, 0
        %v979 = vsel %vm923, %v711, 0
        %v982 = vsel %vm923, %v713, 0
        %v985 = vsel %vm923, %v715, 0
        %v988 = vsel %vm923, %v717, 0
        %v991 = vsel %vm923, %v719, 0
        %v994 = vsel %vm923, %v721, 0
        %v997 = vsel %vm923, %v723, 0
        %v1000 = vsel %vm923, %v725, 0
        %v1003 = vsel %vm923, %v727, 0
        %v1006 = vsel %vm923, %v729, 0
        %v1009 = vsel %vm923, %v731, 0
        %v1012 = vsel %vm923, %v733, 0
        %v1015 = vsel %vm923, %v735, 0
        %v1018 = vsel %vm923, %v737, 0
        %v1021 = vsel %vm923, %v739, 0
        %v1024 = vsel %vm923, %v741, 0
        %v1027 = vsel %vm923, %v743, 0
        %v1030 = vsel %vm923, %v745, 0
        %v1033 = vsel %vm923, %v747, 0
        %v1036 = vsel %vm923, %v749, 0
        %v1039 = vsel %vm923, %v751, 0
        %v1042 = vsel %vm923, %v753, 0
        %v1045 = vsel %vm923, %v755, 0
        %v1048 = vsel %vm923, %v757, 0
        %v1051 = vsel %vm923, %v759, 0
        %v1054 = vsel %vm923, %v761, 0
        %v1057 = vsel %vm923, %v763, 0
        %v1060 = vsel %vm923, %v765, 0
        %v1063 = vsel %vm923, %v767, 0
        %v1066 = vsel %vm923, %v769, 0
        %v1069 = vsel %vm923, %v771, 0
        %v1072 = vsel %vm923, %v773, 0
        %v1075 = vsel %vm923, %v775, 0
        %v1078 = vsel %vm923, %v777, 0
        %v1081 = vsel %vm923, %v779, 0
        %v1084 = vsel %vm923, %v781, 0
        %v1087 = vsel %vm923, %v783, 0
        %v1090 = vsel %vm923, %v785, 0
        %v1093 = vsel %vm923, %v787, 0
        %v1096 = vsel %vm923, %v789, 0
        %v1099 = vsel %vm923, %v791, 0
        %v1102 = vsel %vm923, %v793, 0
        %v1105 = vsel %vm923, %v795, 0
        %v1108 = vsel %vm923, %v797, 0
        %v1111 = vsel %vm923, %v799, 0
        %v1114 = vsel %vm923, %v801, 0
        %vm1116 = vcmask 1040384
        %vm1117 = vcmask 1041408
        %v1118 = vsel %vm1116, 4294967295, 65535
        %v1119 = vsel %vm1117, %v1118, 0
        %v1121 = vand.u32 %v913, %v1119
        %1123 = vmatprep.subr.bf16.mxu0 0
        %1124 = vmatpush1.bf16.msra.mxu0 %v904
        %1125 = vmatprep.subr.bf16.mxu0 0
        %1126 = vmatpush1.bf16.msra.mxu0 %v905
        %1127 = vmatprep.subr.bf16.mxu0 0
        %1128 = vmatpush1.bf16.msra.mxu0 %v906
        %1129 = vmatprep.subr.bf16.mxu0 0
        %1130 = vmatpush1.bf16.msra.mxu0 %v907
        %1131 = vmatprep.subr.bf16.mxu0 0
        %1132 = vmatpush1.bf16.msra.mxu0 %v908
        %1133 = vmatprep.subr.bf16.mxu0 0
        %1134 = vmatpush1.bf16.msra.mxu0 %v909
        %1135 = vmatprep.subr.bf16.mxu0 0
        %1136 = vmatpush1.bf16.msra.mxu0 %v910
        %1137 = vmatprep.subr.bf16.mxu0 0
        %1138 = vmatpush1.bf16.msra.mxu0 %v911
        %1139 = vmatprep.subr.bf16.mxu0 0
        %1140 = vmatpush1.bf16.msra.mxu0 %v912
        %1141 = vmatprep.subr.bf16.mxu0 0
        %1142 = vmatpush1.bf16.msra.mxu0 %v1121
        %1143 = vmatprep.subr.bf16.mxu0 0
        %1144 = vmatpush1.bf16.msra.mxu0 0
        %1145 = vmatprep.subr.bf16.mxu0 0
        %1146 = vmatpush1.bf16.msra.mxu0 0
        %1147 = vmatprep.subr.bf16.mxu0 0
        %1148 = vmatpush1.bf16.msra.mxu0 0
        %1149 = vmatprep.subr.bf16.mxu0 0
        %1150 = vmatpush1.bf16.msra.mxu0 0
        %1151 = vmatprep.subr.bf16.mxu0 0
        %1152 = vmatpush1.bf16.msra.mxu0 0
        %1153 = vmatprep.subr.bf16.mxu0 0
        %1154 = vmatpush1.bf16.msra.mxu0 0
        %1155 = vmatprep.mubr.bf16.mxu0 %v925
        %1156 = vmatmul.mubr.bf16.gmra.mrb[0].mxu0 %v674
        %v1157 = vpop.f32.mrb[0].mxu0
        %v1158 = vadd.f32 0.0, %v1157
        %v1159 = vpop.f32.mrb[0].mxu0
        %v1160 = vpop.f32.mrb[0].mxu0
        %v1161 = vadd.f32 0.0, %v1160
        %v1162 = vpop.f32.mrb[0].mxu0
        %1163 = vmatprep.mubr.bf16.mxu0 %v928
        %1164 = vmatmul.mubr.bf16.gmra.mrb[0].mxu0 %v676
        %v1165 = vpop.f32.mrb[0].mxu0
        %v1166 = vadd.f32 0.0, %v1165
        %v1167 = vpop.f32.mrb[0].mxu0
        %v1168 = vpop.f32.mrb[0].mxu0
        %v1169 = vadd.f32 0.0, %v1168
        %v1170 = vpop.f32.mrb[0].mxu0
        %1171 = vmatprep.mubr.bf16.mxu0 %v931
        %1172 = vmatmul.mubr.bf16.gmra.mrb[0].mxu0 %v678
        %v1173 = vpop.f32.mrb[0].mxu0
        %v1174 = vadd.f32 0.0, %v1173
        %v1175 = vpop.f32.mrb[0].mxu0
        %v1176 = vpop.f32.mrb[0].mxu0
        %v1177 = vadd.f32 0.0, %v1176
        %v1178 = vpop.f32.mrb[0].mxu0
        %1179 = vmatprep.mubr.bf16.mxu0 %v934
        %1180 = vmatmul.mubr.bf16.gmra.mrb[0].mxu0 %v680
        %v1181 = vpop.f32.mrb[0].mxu0
        %v1182 = vadd.f32 0.0, %v1181
        %v1183 = vpop.f32.mrb[0].mxu0
        %v1184 = vpop.f32.mrb[0].mxu0
        %v1185 = vadd.f32 0.0, %v1184
        %v1186 = vpop.f32.mrb[0].mxu0
        %1187 = vmatprep.mubr.bf16.mxu0 %v937
        %1188 = vmatmul.mubr.bf16.gmra.mrb[0].mxu0 %v682
        %v1189 = vpop.f32.mrb[0].mxu0
        %v1190 = vadd.f32 0.0, %v1189
        %v1191 = vpop.f32.mrb[0].mxu0
        %v1192 = vpop.f32.mrb[0].mxu0
        %v1193 = vadd.f32 0.0, %v1192
        %v1194 = vpop.f32.mrb[0].mxu0
        %1195 = vmatprep.mubr.bf16.mxu0 %v940
        %1196 = vmatmul.mubr.bf16.gmra.mrb[0].mxu0 %v684
        %v1197 = vpop.f32.mrb[0].mxu0
        %v1198 = vadd.f32 0.0, %v1197
        %v1199 = vpop.f32.mrb[0].mxu0
        %v1200 = vpop.f32.mrb[0].mxu0
        %v1201 = vadd.f32 0.0, %v1200
        %v1202 = vpop.f32.mrb[0].mxu0
        %1203 = vmatprep.mubr.bf16.mxu0 %v943
        %1204 = vmatmul.mubr.bf16.gmra.mrb[0].mxu0 %v686
        %v1205 = vpop.f32.mrb[0].mxu0
        %v1206 = vadd.f32 0.0, %v1205
        %v1207 = vpop.f32.mrb[0].mxu0
        %v1208 = vpop.f32.mrb[0].mxu0
        %v1209 = vadd.f32 0.0, %v1208
        %v1210 = vpop.f32.mrb[0].mxu0
        %1211 = vmatprep.mubr.bf16.mxu0 %v946
        %1212 = vmatmul.mubr.bf16.gmra.mrb[0].mxu0 %v688
        %v1213 = vpop.f32.mrb[0].mxu0
        %v1214 = vadd.f32 0.0, %v1213
        %v1215 = vpop.f32.mrb[0].mxu0
        %v1216 = vpop.f32.mrb[0].mxu0
        %v1217 = vadd.f32 0.0, %v1216
        %v1218 = vpop.f32.mrb[0].mxu0
        %1219 = vmatprep.mubr.bf16.mxu0 %v949
        %1220 = vmatmul.mubr.bf16.gmra.mrb[0].mxu0 %v690
        %v1221 = vpop.f32.mrb[0].mxu0
        %v1222 = vadd.f32 0.0, %v1221
        %v1223 = vpop.f32.mrb[0].mxu0
        %v1224 = vpop.f32.mrb[0].mxu0
        %v1225 = vadd.f32 0.0, %v1224
        %v1226 = vpop.f32.mrb[0].mxu0
        %1227 = vmatprep.mubr.bf16.mxu0 %v952
        %1228 = vmatmul.mubr.bf16.gmra.mrb[0].mxu0 %v692
        %v1229 = vpop.f32.mrb[0].mxu0
        %v1230 = vadd.f32 0.0, %v1229
        %v1231 = vpop.f32.mrb[0].mxu0
        %v1232 = vpop.f32.mrb[0].mxu0
        %v1233 = vadd.f32 0.0, %v1232
        %v1234 = vpop.f32.mrb[0].mxu0
        %1235 = vmatprep.mubr.bf16.mxu0 %v955
        %1236 = vmatmul.mubr.bf16.gmra.mrb[0].mxu0 %v694
        %v1237 = vpop.f32.mrb[0].mxu0
        %v1238 = vadd.f32 0.0, %v1237
        %v1239 = vpop.f32.mrb[0].mxu0
        %v1240 = vpop.f32.mrb[0].mxu0
        %v1241 = vadd.f32 0.0, %v1240
        %v1242 = vpop.f32.mrb[0].mxu0
        %1243 = vmatprep.mubr.bf16.mxu0 %v958
        %1244 = vmatmul.mubr.bf16.gmra.mrb[0].mxu0 %v696
        %v1245 = vpop.f32.mrb[0].mxu0
        %v1246 = vadd.f32 0.0, %v1245
        %v1247 = vpop.f32.mrb[0].mxu0
        %v1248 = vpop.f32.mrb[0].mxu0
        %v1249 = vadd.f32 0.0, %v1248
        %v1250 = vpop.f32.mrb[0].mxu0
        %1251 = vmatprep.mubr.bf16.mxu0 %v961
        %1252 = vmatmul.mubr.bf16.gmra.mrb[0].mxu0 %v698
        %v1253 = vpop.f32.mrb[0].mxu0
        %v1254 = vadd.f32 0.0, %v1253
        %v1255 = vpop.f32.mrb[0].mxu0
        %v1256 = vpop.f32.mrb[0].mxu0
        %v1257 = vadd.f32 0.0, %v1256
        %v1258 = vpop.f32.mrb[0].mxu0
        %1259 = vmatprep.mubr.bf16.mxu0 %v964
        %1260 = vmatmul.mubr.bf16.gmra.mrb[0].mxu0 %v700
        %v1261 = vpop.f32.mrb[0].mxu0
        %v1262 = vadd.f32 0.0, %v1261
        %v1263 = vpop.f32.mrb[0].mxu0
        %v1264 = vpop.f32.mrb[0].mxu0
        %v1265 = vadd.f32 0.0, %v1264
        %v1266 = vpop.f32.mrb[0].mxu0
        %1267 = vmatprep.mubr.bf16.mxu0 %v967
        %1268 = vmatmul.mubr.bf16.gmra.mrb[0].mxu0 %v702
        %v1269 = vpop.f32.mrb[0].mxu0
        %v1270 = vadd.f32 0.0, %v1269
        %v1271 = vpop.f32.mrb[0].mxu0
        %v1272 = vpop.f32.mrb[0].mxu0
        %v1273 = vadd.f32 0.0, %v1272
        %v1274 = vpop.f32.mrb[0].mxu0
        %1275 = vmatprep.mubr.bf16.mxu0 %v970
        %1276 = vmatmul.mubr.bf16.gmra.mrb[0].mxu0 %v704
        %v1277 = vpop.f32.mrb[0].mxu0
        %v1278 = vadd.f32 0.0, %v1277
        %v1279 = vpop.f32.mrb[0].mxu0
        %v1280 = vpop.f32.mrb[0].mxu0
        %v1281 = vadd.f32 0.0, %v1280
        %v1282 = vpop.f32.mrb[0].mxu0
        %1283 = vmatprep.mubr.bf16.mxu0 %v973
        %1284 = vmatmul.mubr.bf16.gmra.mrb[0].mxu0 %v706
        %v1285 = vpop.f32.mrb[0].mxu0
        %v1286 = vadd.f32 0.0, %v1285
        %v1287 = vpop.f32.mrb[0].mxu0
        %v1288 = vpop.f32.mrb[0].mxu0
        %v1289 = vadd.f32 0.0, %v1288
        %v1290 = vpop.f32.mrb[0].mxu0
        %1291 = vmatprep.mubr.bf16.mxu0 %v976
        %1292 = vmatmul.mubr.bf16.gmra.mrb[0].mxu0 %v708
        %v1293 = vpop.f32.mrb[0].mxu0
        %v1294 = vadd.f32 0.0, %v1293
        %v1295 = vpop.f32.mrb[0].mxu0
        %v1296 = vpop.f32.mrb[0].mxu0
        %v1297 = vadd.f32 0.0, %v1296
        %v1298 = vpop.f32.mrb[0].mxu0
        %1299 = vmatprep.mubr.bf16.mxu0 %v979
        %1300 = vmatmul.mubr.bf16.gmra.mrb[0].mxu0 %v710
        %v1301 = vpop.f32.mrb[0].mxu0
        %v1302 = vadd.f32 0.0, %v1301
        %v1303 = vpop.f32.mrb[0].mxu0
        %v1304 = vpop.f32.mrb[0].mxu0
        %v1305 = vadd.f32 0.0, %v1304
        %v1306 = vpop.f32.mrb[0].mxu0
        %1307 = vmatprep.mubr.bf16.mxu0 %v982
        %1308 = vmatmul.mubr.bf16.gmra.mrb[0].mxu0 %v712
        %v1309 = vpop.f32.mrb[0].mxu0
        %v1310 = vadd.f32 0.0, %v1309
        %v1311 = vpop.f32.mrb[0].mxu0
        %v1312 = vpop.f32.mrb[0].mxu0
        %v1313 = vadd.f32 0.0, %v1312
        %v1314 = vpop.f32.mrb[0].mxu0
        %1315 = vmatprep.mubr.bf16.mxu0 %v985
        %1316 = vmatmul.mubr.bf16.gmra.mrb[0].mxu0 %v714
        %v1317 = vpop.f32.mrb[0].mxu0
        %v1318 = vadd.f32 0.0, %v1317
        %v1319 = vpop.f32.mrb[0].mxu0
        %v1320 = vpop.f32.mrb[0].mxu0
        %v1321 = vadd.f32 0.0, %v1320
        %v1322 = vpop.f32.mrb[0].mxu0
        %1323 = vmatprep.mubr.bf16.mxu0 %v988
        %1324 = vmatmul.mubr.bf16.gmra.mrb[0].mxu0 %v716
        %v1325 = vpop.f32.mrb[0].mxu0
        %v1326 = vadd.f32 0.0, %v1325
        %v1327 = vpop.f32.mrb[0].mxu0
        %v1328 = vpop.f32.mrb[0].mxu0
        %v1329 = vadd.f32 0.0, %v1328
        %v1330 = vpop.f32.mrb[0].mxu0
        %1331 = vmatprep.mubr.bf16.mxu0 %v991
        %1332 = vmatmul.mubr.bf16.gmra.mrb[0].mxu0 %v718
        %v1333 = vpop.f32.mrb[0].mxu0
        %v1334 = vadd.f32 0.0, %v1333
        %v1335 = vpop.f32.mrb[0].mxu0
        %v1336 = vpop.f32.mrb[0].mxu0
        %v1337 = vadd.f32 0.0, %v1336
        %v1338 = vpop.f32.mrb[0].mxu0
        %1339 = vmatprep.mubr.bf16.mxu0 %v994
        %1340 = vmatmul.mubr.bf16.gmra.mrb[0].mxu0 %v720
        %v1341 = vpop.f32.mrb[0].mxu0
        %v1342 = vadd.f32 0.0, %v1341
        %v1343 = vpop.f32.mrb[0].mxu0
        %v1344 = vpop.f32.mrb[0].mxu0
        %v1345 = vadd.f32 0.0, %v1344
        %v1346 = vpop.f32.mrb[0].mxu0
        %1347 = vmatprep.mubr.bf16.mxu0 %v997
        %1348 = vmatmul.mubr.bf16.gmra.mrb[0].mxu0 %v722
        %v1349 = vpop.f32.mrb[0].mxu0
        %v1350 = vadd.f32 0.0, %v1349
        %v1351 = vpop.f32.mrb[0].mxu0
        %v1352 = vpop.f32.mrb[0].mxu0
        %v1353 = vadd.f32 0.0, %v1352
        %v1354 = vpop.f32.mrb[0].mxu0
        %1355 = vmatprep.mubr.bf16.mxu0 %v1000
        %1356 = vmatmul.mubr.bf16.gmra.mrb[0].mxu0 %v724
        %v1357 = vpop.f32.mrb[0].mxu0
        %v1358 = vadd.f32 0.0, %v1357
        %v1359 = vpop.f32.mrb[0].mxu0
        %v1360 = vpop.f32.mrb[0].mxu0
        %v1361 = vadd.f32 0.0, %v1360
        %v1362 = vpop.f32.mrb[0].mxu0
        %1363 = vmatprep.mubr.bf16.mxu0 %v1003
        %1364 = vmatmul.mubr.bf16.gmra.mrb[0].mxu0 %v726
        %v1365 = vpop.f32.mrb[0].mxu0
        %v1366 = vadd.f32 0.0, %v1365
        %v1367 = vpop.f32.mrb[0].mxu0
        %v1368 = vpop.f32.mrb[0].mxu0
        %v1369 = vadd.f32 0.0, %v1368
        %v1370 = vpop.f32.mrb[0].mxu0
        %1371 = vmatprep.mubr.bf16.mxu0 %v1006
        %1372 = vmatmul.mubr.bf16.gmra.mrb[0].mxu0 %v728
        %v1373 = vpop.f32.mrb[0].mxu0
        %v1374 = vadd.f32 0.0, %v1373
        %v1375 = vpop.f32.mrb[0].mxu0
        %v1376 = vpop.f32.mrb[0].mxu0
        %v1377 = vadd.f32 0.0, %v1376
        %v1378 = vpop.f32.mrb[0].mxu0
        %1379 = vmatprep.mubr.bf16.mxu0 %v1009
        %1380 = vmatmul.mubr.bf16.gmra.mrb[0].mxu0 %v730
        %v1381 = vpop.f32.mrb[0].mxu0
        %v1382 = vadd.f32 0.0, %v1381
        %v1383 = vpop.f32.mrb[0].mxu0
        %v1384 = vpop.f32.mrb[0].mxu0
        %v1385 = vadd.f32 0.0, %v1384
        %v1386 = vpop.f32.mrb[0].mxu0
        %1387 = vmatprep.mubr.bf16.mxu0 %v1012
        %1388 = vmatmul.mubr.bf16.gmra.mrb[0].mxu0 %v732
        %v1389 = vpop.f32.mrb[0].mxu0
        %v1390 = vadd.f32 0.0, %v1389
        %v1391 = vpop.f32.mrb[0].mxu0
        %v1392 = vpop.f32.mrb[0].mxu0
        %v1393 = vadd.f32 0.0, %v1392
        %v1394 = vpop.f32.mrb[0].mxu0
        %1395 = vmatprep.mubr.bf16.mxu0 %v1015
        %1396 = vmatmul.mubr.bf16.gmra.mrb[0].mxu0 %v734
        %v1397 = vpop.f32.mrb[0].mxu0
        %v1398 = vadd.f32 0.0, %v1397
        %v1399 = vpop.f32.mrb[0].mxu0
        %v1400 = vpop.f32.mrb[0].mxu0
        %v1401 = vadd.f32 0.0, %v1400
        %v1402 = vpop.f32.mrb[0].mxu0
        %1403 = vmatprep.mubr.bf16.mxu0 %v1018
        %1404 = vmatmul.mubr.bf16.gmra.mrb[0].mxu0 %v736
        %v1405 = vpop.f32.mrb[0].mxu0
        %v1406 = vadd.f32 0.0, %v1405
        %v1407 = vpop.f32.mrb[0].mxu0
        %v1408 = vpop.f32.mrb[0].mxu0
        %v1409 = vadd.f32 0.0, %v1408
        %v1410 = vpop.f32.mrb[0].mxu0
        %1411 = vmatprep.mubr.bf16.mxu0 %v1021
        %1412 = vmatmul.mubr.bf16.gmra.mrb[0].mxu0 %v738
        %v1413 = vpop.f32.mrb[0].mxu0
        %v1414 = vadd.f32 0.0, %v1413
        %v1415 = vpop.f32.mrb[0].mxu0
        %v1416 = vpop.f32.mrb[0].mxu0
        %v1417 = vadd.f32 0.0, %v1416
        %v1418 = vpop.f32.mrb[0].mxu0
        %1419 = vmatprep.mubr.bf16.mxu0 %v1024
        %1420 = vmatmul.mubr.bf16.gmra.mrb[0].mxu0 %v740
        %v1421 = vpop.f32.mrb[0].mxu0
        %v1422 = vadd.f32 0.0, %v1421
        %v1423 = vpop.f32.mrb[0].mxu0
        %v1424 = vpop.f32.mrb[0].mxu0
        %v1425 = vadd.f32 0.0, %v1424
        %v1426 = vpop.f32.mrb[0].mxu0
        %1427 = vmatprep.mubr.bf16.mxu0 %v1027
        %1428 = vmatmul.mubr.bf16.gmra.mrb[0].mxu0 %v742
        %v1429 = vpop.f32.mrb[0].mxu0
        %v1430 = vadd.f32 0.0, %v1429
        %v1431 = vpop.f32.mrb[0].mxu0
        %v1432 = vpop.f32.mrb[0].mxu0
        %v1433 = vadd.f32 0.0, %v1432
        %v1434 = vpop.f32.mrb[0].mxu0
        %1435 = vmatprep.mubr.bf16.mxu0 %v1030
        %1436 = vmatmul.mubr.bf16.gmra.mrb[0].mxu0 %v744
        %v1437 = vpop.f32.mrb[0].mxu0
        %v1438 = vadd.f32 0.0, %v1437
        %v1439 = vpop.f32.mrb[0].mxu0
        %v1440 = vpop.f32.mrb[0].mxu0
        %v1441 = vadd.f32 0.0, %v1440
        %v1442 = vpop.f32.mrb[0].mxu0
        %1443 = vmatprep.mubr.bf16.mxu0 %v1033
        %1444 = vmatmul.mubr.bf16.gmra.mrb[0].mxu0 %v746
        %v1445 = vpop.f32.mrb[0].mxu0
        %v1446 = vadd.f32 0.0, %v1445
        %v1447 = vpop.f32.mrb[0].mxu0
        %v1448 = vpop.f32.mrb[0].mxu0
        %v1449 = vadd.f32 0.0, %v1448
        %v1450 = vpop.f32.mrb[0].mxu0
        %1451 = vmatprep.mubr.bf16.mxu0 %v1036
        %1452 = vmatmul.mubr.bf16.gmra.mrb[0].mxu0 %v748
        %v1453 = vpop.f32.mrb[0].mxu0
        %v1454 = vadd.f32 0.0, %v1453
        %v1455 = vpop.f32.mrb[0].mxu0
        %v1456 = vpop.f32.mrb[0].mxu0
        %v1457 = vadd.f32 0.0, %v1456
        %v1458 = vpop.f32.mrb[0].mxu0
        %1459 = vmatprep.mubr.bf16.mxu0 %v1039
        %1460 = vmatmul.mubr.bf16.gmra.mrb[0].mxu0 %v750
        %v1461 = vpop.f32.mrb[0].mxu0
        %v1462 = vadd.f32 0.0, %v1461
        %v1463 = vpop.f32.mrb[0].mxu0
        %v1464 = vpop.f32.mrb[0].mxu0
        %v1465 = vadd.f32 0.0, %v1464
        %v1466 = vpop.f32.mrb[0].mxu0
        %1467 = vmatprep.mubr.bf16.mxu0 %v1042
        %1468 = vmatmul.mubr.bf16.gmra.mrb[0].mxu0 %v752
        %v1469 = vpop.f32.mrb[0].mxu0
        %v1470 = vadd.f32 0.0, %v1469
        %v1471 = vpop.f32.mrb[0].mxu0
        %v1472 = vpop.f32.mrb[0].mxu0
        %v1473 = vadd.f32 0.0, %v1472
        %v1474 = vpop.f32.mrb[0].mxu0
        %1475 = vmatprep.mubr.bf16.mxu0 %v1045
        %1476 = vmatmul.mubr.bf16.gmra.mrb[0].mxu0 %v754
        %v1477 = vpop.f32.mrb[0].mxu0
        %v1478 = vadd.f32 0.0, %v1477
        %v1479 = vpop.f32.mrb[0].mxu0
        %v1480 = vpop.f32.mrb[0].mxu0
        %v1481 = vadd.f32 0.0, %v1480
        %v1482 = vpop.f32.mrb[0].mxu0
        %1483 = vmatprep.mubr.bf16.mxu0 %v1048
        %1484 = vmatmul.mubr.bf16.gmra.mrb[0].mxu0 %v756
        %v1485 = vpop.f32.mrb[0].mxu0
        %v1486 = vadd.f32 0.0, %v1485
        %v1487 = vpop.f32.mrb[0].mxu0
        %v1488 = vpop.f32.mrb[0].mxu0
        %v1489 = vadd.f32 0.0, %v1488
        %v1490 = vpop.f32.mrb[0].mxu0
        %1491 = vmatprep.mubr.bf16.mxu0 %v1051
        %1492 = vmatmul.mubr.bf16.gmra.mrb[0].mxu0 %v758
        %v1493 = vpop.f32.mrb[0].mxu0
        %v1494 = vadd.f32 0.0, %v1493
        %v1495 = vpop.f32.mrb[0].mxu0
        %v1496 = vpop.f32.mrb[0].mxu0
        %v1497 = vadd.f32 0.0, %v1496
        %v1498 = vpop.f32.mrb[0].mxu0
        %1499 = vmatprep.mubr.bf16.mxu0 %v1054
        %1500 = vmatmul.mubr.bf16.gmra.mrb[0].mxu0 %v760
        %v1501 = vpop.f32.mrb[0].mxu0
        %v1502 = vadd.f32 0.0, %v1501
        %v1503 = vpop.f32.mrb[0].mxu0
        %v1504 = vpop.f32.mrb[0].mxu0
        %v1505 = vadd.f32 0.0, %v1504
        %v1506 = vpop.f32.mrb[0].mxu0
        %1507 = vmatprep.mubr.bf16.mxu0 %v1057
        %1508 = vmatmul.mubr.bf16.gmra.mrb[0].mxu0 %v762
        %v1509 = vpop.f32.mrb[0].mxu0
        %v1510 = vadd.f32 0.0, %v1509
        %v1511 = vpop.f32.mrb[0].mxu0
        %v1512 = vpop.f32.mrb[0].mxu0
        %v1513 = vadd.f32 0.0, %v1512
        %v1514 = vpop.f32.mrb[0].mxu0
        %1515 = vmatprep.mubr.bf16.mxu0 %v1060
        %1516 = vmatmul.mubr.bf16.gmra.mrb[0].mxu0 %v764
        %v1517 = vpop.f32.mrb[0].mxu0
        %v1518 = vadd.f32 0.0, %v1517
        %v1519 = vpop.f32.mrb[0].mxu0
        %v1520 = vpop.f32.mrb[0].mxu0
        %v1521 = vadd.f32 0.0, %v1520
        %v1522 = vpop.f32.mrb[0].mxu0
        %1523 = vmatprep.mubr.bf16.mxu0 %v1063
        %1524 = vmatmul.mubr.bf16.gmra.mrb[0].mxu0 %v766
        %v1525 = vpop.f32.mrb[0].mxu0
        %v1526 = vadd.f32 0.0, %v1525
        %v1527 = vpop.f32.mrb[0].mxu0
        %v1528 = vpop.f32.mrb[0].mxu0
        %v1529 = vadd.f32 0.0, %v1528
        %v1530 = vpop.f32.mrb[0].mxu0
        %1531 = vmatprep.mubr.bf16.mxu0 %v1066
        %1532 = vmatmul.mubr.bf16.gmra.mrb[0].mxu0 %v768
        %v1533 = vpop.f32.mrb[0].mxu0
        %v1534 = vadd.f32 0.0, %v1533
        %v1535 = vpop.f32.mrb[0].mxu0
        %v1536 = vpop.f32.mrb[0].mxu0
        %v1537 = vadd.f32 0.0, %v1536
        %v1538 = vpop.f32.mrb[0].mxu0
        %1539 = vmatprep.mubr.bf16.mxu0 %v1069
        %1540 = vmatmul.mubr.bf16.gmra.mrb[0].mxu0 %v770
        %v1541 = vpop.f32.mrb[0].mxu0
        %v1542 = vadd.f32 0.0, %v1541
        %v1543 = vpop.f32.mrb[0].mxu0
        %v1544 = vpop.f32.mrb[0].mxu0
        %v1545 = vadd.f32 0.0, %v1544
        %v1546 = vpop.f32.mrb[0].mxu0
        %1547 = vmatprep.mubr.bf16.mxu0 %v1072
        %1548 = vmatmul.mubr.bf16.gmra.mrb[0].mxu0 %v772
        %v1549 = vpop.f32.mrb[0].mxu0
        %v1550 = vadd.f32 0.0, %v1549
        %v1551 = vpop.f32.mrb[0].mxu0
        %v1552 = vpop.f32.mrb[0].mxu0
        %v1553 = vadd.f32 0.0, %v1552
        %v1554 = vpop.f32.mrb[0].mxu0
        %1555 = vmatprep.mubr.bf16.mxu0 %v1075
        %1556 = vmatmul.mubr.bf16.gmra.mrb[0].mxu0 %v774
        %v1557 = vpop.f32.mrb[0].mxu0
        %v1558 = vadd.f32 0.0, %v1557
        %v1559 = vpop.f32.mrb[0].mxu0
        %v1560 = vpop.f32.mrb[0].mxu0
        %v1561 = vadd.f32 0.0, %v1560
        %v1562 = vpop.f32.mrb[0].mxu0
        %1563 = vmatprep.mubr.bf16.mxu0 %v1078
        %1564 = vmatmul.mubr.bf16.gmra.mrb[0].mxu0 %v776
        %v1565 = vpop.f32.mrb[0].mxu0
        %v1566 = vadd.f32 0.0, %v1565
        %v1567 = vpop.f32.mrb[0].mxu0
        %v1568 = vpop.f32.mrb[0].mxu0
        %v1569 = vadd.f32 0.0, %v1568
        %v1570 = vpop.f32.mrb[0].mxu0
        %1571 = vmatprep.mubr.bf16.mxu0 %v1081
        %1572 = vmatmul.mubr.bf16.gmra.mrb[0].mxu0 %v778
        %v1573 = vpop.f32.mrb[0].mxu0
        %v1574 = vadd.f32 0.0, %v1573
        %v1575 = vpop.f32.mrb[0].mxu0
        %v1576 = vpop.f32.mrb[0].mxu0
        %v1577 = vadd.f32 0.0, %v1576
        %v1578 = vpop.f32.mrb[0].mxu0
        %1579 = vmatprep.mubr.bf16.mxu0 %v1084
        %1580 = vmatmul.mubr.bf16.gmra.mrb[0].mxu0 %v780
        %v1581 = vpop.f32.mrb[0].mxu0
        %v1582 = vadd.f32 0.0, %v1581
        %v1583 = vpop.f32.mrb[0].mxu0
        %v1584 = vpop.f32.mrb[0].mxu0
        %v1585 = vadd.f32 0.0, %v1584
        %v1586 = vpop.f32.mrb[0].mxu0
        %1587 = vmatprep.mubr.bf16.mxu0 %v1087
        %1588 = vmatmul.mubr.bf16.gmra.mrb[0].mxu0 %v782
        %v1589 = vpop.f32.mrb[0].mxu0
        %v1590 = vadd.f32 0.0, %v1589
        %v1591 = vpop.f32.mrb[0].mxu0
        %v1592 = vpop.f32.mrb[0].mxu0
        %v1593 = vadd.f32 0.0, %v1592
        %v1594 = vpop.f32.mrb[0].mxu0
        %1595 = vmatprep.mubr.bf16.mxu0 %v1090
        %1596 = vmatmul.mubr.bf16.gmra.mrb[0].mxu0 %v784
        %v1597 = vpop.f32.mrb[0].mxu0
        %v1598 = vadd.f32 0.0, %v1597
        %v1599 = vpop.f32.mrb[0].mxu0
        %v1600 = vpop.f32.mrb[0].mxu0
        %v1601 = vadd.f32 0.0, %v1600
        %v1602 = vpop.f32.mrb[0].mxu0
        %1603 = vmatprep.mubr.bf16.mxu0 %v1093
        %1604 = vmatmul.mubr.bf16.gmra.mrb[0].mxu0 %v786
        %v1605 = vpop.f32.mrb[0].mxu0
        %v1606 = vadd.f32 0.0, %v1605
        %v1607 = vpop.f32.mrb[0].mxu0
        %v1608 = vpop.f32.mrb[0].mxu0
        %v1609 = vadd.f32 0.0, %v1608
        %v1610 = vpop.f32.mrb[0].mxu0
        %1611 = vmatprep.mubr.bf16.mxu0 %v1096
        %1612 = vmatmul.mubr.bf16.gmra.mrb[0].mxu0 %v788
        %v1613 = vpop.f32.mrb[0].mxu0
        %v1614 = vadd.f32 0.0, %v1613
        %v1615 = vpop.f32.mrb[0].mxu0
        %v1616 = vpop.f32.mrb[0].mxu0
        %v1617 = vadd.f32 0.0, %v1616
        %v1618 = vpop.f32.mrb[0].mxu0
        %1619 = vmatprep.mubr.bf16.mxu0 %v1099
        %1620 = vmatmul.mubr.bf16.gmra.mrb[0].mxu0 %v790
        %v1621 = vpop.f32.mrb[0].mxu0
        %v1622 = vadd.f32 0.0, %v1621
        %v1623 = vpop.f32.mrb[0].mxu0
        %v1624 = vpop.f32.mrb[0].mxu0
        %v1625 = vadd.f32 0.0, %v1624
        %v1626 = vpop.f32.mrb[0].mxu0
        %1627 = vmatprep.mubr.bf16.mxu0 %v1102
        %1628 = vmatmul.mubr.bf16.gmra.mrb[0].mxu0 %v792
        %v1629 = vpop.f32.mrb[0].mxu0
        %v1630 = vadd.f32 0.0, %v1629
        %v1631 = vpop.f32.mrb[0].mxu0
        %v1632 = vpop.f32.mrb[0].mxu0
        %v1633 = vadd.f32 0.0, %v1632
        %v1634 = vpop.f32.mrb[0].mxu0
        %1635 = vmatprep.mubr.bf16.mxu0 %v1105
        %1636 = vmatmul.mubr.bf16.gmra.mrb[0].mxu0 %v794
        %v1637 = vpop.f32.mrb[0].mxu0
        %v1638 = vadd.f32 0.0, %v1637
        %v1639 = vpop.f32.mrb[0].mxu0
        %v1640 = vpop.f32.mrb[0].mxu0
        %v1641 = vadd.f32 0.0, %v1640
        %v1642 = vpop.f32.mrb[0].mxu0
        %1643 = vmatprep.mubr.bf16.mxu0 %v1108
        %1644 = vmatmul.mubr.bf16.gmra.mrb[0].mxu0 %v796
        %v1645 = vpop.f32.mrb[0].mxu0
        %v1646 = vadd.f32 0.0, %v1645
        %v1647 = vpop.f32.mrb[0].mxu0
        %v1648 = vpop.f32.mrb[0].mxu0
        %v1649 = vadd.f32 0.0, %v1648
        %v1650 = vpop.f32.mrb[0].mxu0
        %1651 = vmatprep.mubr.bf16.mxu0 %v1111
        %1652 = vmatmul.mubr.bf16.gmra.mrb[0].mxu0 %v798
        %v1653 = vpop.f32.mrb[0].mxu0
        %v1654 = vadd.f32 0.0, %v1653
        %v1655 = vpop.f32.mrb[0].mxu0
        %v1656 = vpop.f32.mrb[0].mxu0
        %v1657 = vadd.f32 0.0, %v1656
        %v1658 = vpop.f32.mrb[0].mxu0
        %1659 = vmatprep.mubr.bf16.mxu0 %v1114
        %1660 = vmatmul.mubr.bf16.gmra.mrb[0].mxu0 %v800
        %v1661 = vpop.f32.mrb[0].mxu0
        %v1662 = vadd.f32 0.0, %v1661
        %v1663 = vpop.f32.mrb[0].mxu0
        %v1664 = vpop.f32.mrb[0].mxu0
        %v1665 = vadd.f32 0.0, %v1664
        %v1666 = vpop.f32.mrb[0].mxu0
        %1667 = vdwg.mxu0
        %vm1668 = vcmask 261120
        %v1669 = vsel %vm1668, %v1158, 0.0
        %v1670 = vsel %vm1668, %v1161, 0.0
        %v1671 = vadd.f32 %v1669, %v1670
        %v1672 = vsel %vm1668, %v1166, 0.0
        %v1673 = vadd.f32 %v1671, %v1672
        %v1674 = vsel %vm1668, %v1169, 0.0
        %v1675 = vadd.f32 %v1673, %v1674
        %v1676 = vsel %vm1668, %v1174, 0.0
        %v1677 = vadd.f32 %v1675, %v1676
        %v1678 = vsel %vm1668, %v1177, 0.0
        %v1679 = vadd.f32 %v1677, %v1678
        %v1680 = vsel %vm1668, %v1182, 0.0
        %v1681 = vadd.f32 %v1679, %v1680
        %v1682 = vsel %vm1668, %v1185, 0.0
        %v1683 = vadd.f32 %v1681, %v1682
        %v1684 = vsel %vm1668, %v1190, 0.0
        %v1685 = vadd.f32 %v1683, %v1684
        %v1686 = vsel %vm1668, %v1193, 0.0
        %v1687 = vadd.f32 %v1685, %v1686
        %v1688 = vsel %vm1668, %v1198, 0.0
        %v1689 = vadd.f32 %v1687, %v1688
        %v1690 = vsel %vm1668, %v1201, 0.0
        %v1691 = vadd.f32 %v1689, %v1690
        %v1692 = vsel %vm1668, %v1206, 0.0
        %v1693 = vadd.f32 %v1691, %v1692
        %v1694 = vsel %vm1668, %v1209, 0.0
        %v1695 = vadd.f32 %v1693, %v1694
        %v1696 = vsel %vm1668, %v1214, 0.0
        %v1697 = vadd.f32 %v1695, %v1696
        %v1698 = vsel %vm1668, %v1217, 0.0
        %v1699 = vadd.f32 %v1697, %v1698
        %v1700 = vsel %vm1668, %v1222, 0.0
        %v1701 = vadd.f32 %v1699, %v1700
        %v1702 = vsel %vm1668, %v1225, 0.0
        %v1703 = vadd.f32 %v1701, %v1702
        %v1704 = vsel %vm1668, %v1230, 0.0
        %v1705 = vadd.f32 %v1703, %v1704
        %v1706 = vsel %vm1668, %v1233, 0.0
        %v1707 = vadd.f32 %v1705, %v1706
        %v1708 = vsel %vm1668, %v1238, 0.0
        %v1709 = vadd.f32 %v1707, %v1708
        %v1710 = vsel %vm1668, %v1241, 0.0
        %v1711 = vadd.f32 %v1709, %v1710
        %v1712 = vsel %vm1668, %v1246, 0.0
        %v1713 = vadd.f32 %v1711, %v1712
        %v1714 = vsel %vm1668, %v1249, 0.0
        %v1715 = vadd.f32 %v1713, %v1714
        %v1716 = vsel %vm1668, %v1254, 0.0
        %v1717 = vadd.f32 %v1715, %v1716
        %v1718 = vsel %vm1668, %v1257, 0.0
        %v1719 = vadd.f32 %v1717, %v1718
        %v1720 = vsel %vm1668, %v1262, 0.0
        %v1721 = vadd.f32 %v1719, %v1720
        %v1722 = vsel %vm1668, %v1265, 0.0
        %v1723 = vadd.f32 %v1721, %v1722
        %v1724 = vsel %vm1668, %v1270, 0.0
        %v1725 = vadd.f32 %v1723, %v1724
        %v1726 = vsel %vm1668, %v1273, 0.0
        %v1727 = vadd.f32 %v1725, %v1726
        %v1728 = vsel %vm1668, %v1278, 0.0
        %v1729 = vadd.f32 %v1727, %v1728
        %v1730 = vsel %vm1668, %v1281, 0.0
        %v1731 = vadd.f32 %v1729, %v1730
        %v1732 = vsel %vm1668, %v1286, 0.0
        %v1733 = vadd.f32 %v1731, %v1732
        %v1734 = vsel %vm1668, %v1289, 0.0
        %v1735 = vadd.f32 %v1733, %v1734
        %v1736 = vsel %vm1668, %v1294, 0.0
        %v1737 = vadd.f32 %v1735, %v1736
        %v1738 = vsel %vm1668, %v1297, 0.0
        %v1739 = vadd.f32 %v1737, %v1738
        %v1740 = vsel %vm1668, %v1302, 0.0
        %v1741 = vadd.f32 %v1739, %v1740
        %v1742 = vsel %vm1668, %v1305, 0.0
        %v1743 = vadd.f32 %v1741, %v1742
        %v1744 = vsel %vm1668, %v1310, 0.0
        %v1745 = vadd.f32 %v1743, %v1744
        %v1746 = vsel %vm1668, %v1313, 0.0
        %v1747 = vadd.f32 %v1745, %v1746
        %v1748 = vsel %vm1668, %v1318, 0.0
        %v1749 = vadd.f32 %v1747, %v1748
        %v1750 = vsel %vm1668, %v1321, 0.0
        %v1751 = vadd.f32 %v1749, %v1750
        %v1752 = vsel %vm1668, %v1326, 0.0
        %v1753 = vadd.f32 %v1751, %v1752
        %v1754 = vsel %vm1668, %v1329, 0.0
        %v1755 = vadd.f32 %v1753, %v1754
        %v1756 = vsel %vm1668, %v1334, 0.0
        %v1757 = vadd.f32 %v1755, %v1756
        %v1758 = vsel %vm1668, %v1337, 0.0
        %v1759 = vadd.f32 %v1757, %v1758
        %v1760 = vsel %vm1668, %v1342, 0.0
        %v1761 = vadd.f32 %v1759, %v1760
        %v1762 = vsel %vm1668, %v1345, 0.0
        %v1763 = vadd.f32 %v1761, %v1762
        %v1764 = vsel %vm1668, %v1350, 0.0
        %v1765 = vadd.f32 %v1763, %v1764
        %v1766 = vsel %vm1668, %v1353, 0.0
        %v1767 = vadd.f32 %v1765, %v1766
        %v1768 = vsel %vm1668, %v1358, 0.0
        %v1769 = vadd.f32 %v1767, %v1768
        %v1770 = vsel %vm1668, %v1361, 0.0
        %v1771 = vadd.f32 %v1769, %v1770
        %v1772 = vsel %vm1668, %v1366, 0.0
        %v1773 = vadd.f32 %v1771, %v1772
        %v1774 = vsel %vm1668, %v1369, 0.0
        %v1775 = vadd.f32 %v1773, %v1774
        %v1776 = vsel %vm1668, %v1374, 0.0
        %v1777 = vadd.f32 %v1775, %v1776
        %v1778 = vsel %vm1668, %v1377, 0.0
        %v1779 = vadd.f32 %v1777, %v1778
        %v1780 = vsel %vm1668, %v1382, 0.0
        %v1781 = vadd.f32 %v1779, %v1780
        %v1782 = vsel %vm1668, %v1385, 0.0
        %v1783 = vadd.f32 %v1781, %v1782
        %v1784 = vsel %vm1668, %v1390, 0.0
        %v1785 = vadd.f32 %v1783, %v1784
        %v1786 = vsel %vm1668, %v1393, 0.0
        %v1787 = vadd.f32 %v1785, %v1786
        %v1788 = vsel %vm1668, %v1398, 0.0
        %v1789 = vadd.f32 %v1787, %v1788
        %v1790 = vsel %vm1668, %v1401, 0.0
        %v1791 = vadd.f32 %v1789, %v1790
        %v1792 = vsel %vm1668, %v1406, 0.0
        %v1793 = vadd.f32 %v1791, %v1792
        %v1794 = vsel %vm1668, %v1409, 0.0
        %v1795 = vadd.f32 %v1793, %v1794
        %v1796 = vsel %vm1668, %v1414, 0.0
        %v1797 = vadd.f32 %v1795, %v1796
        %v1798 = vsel %vm1668, %v1417, 0.0
        %v1799 = vadd.f32 %v1797, %v1798
        %v1800 = vsel %vm1668, %v1422, 0.0
        %v1801 = vadd.f32 %v1799, %v1800
        %v1802 = vsel %vm1668, %v1425, 0.0
        %v1803 = vadd.f32 %v1801, %v1802
        %v1804 = vsel %vm1668, %v1430, 0.0
        %v1805 = vadd.f32 %v1803, %v1804
        %v1806 = vsel %vm1668, %v1433, 0.0
        %v1807 = vadd.f32 %v1805, %v1806
        %v1808 = vsel %vm1668, %v1438, 0.0
        %v1809 = vadd.f32 %v1807, %v1808
        %v1810 = vsel %vm1668, %v1441, 0.0
        %v1811 = vadd.f32 %v1809, %v1810
        %v1812 = vsel %vm1668, %v1446, 0.0
        %v1813 = vadd.f32 %v1811, %v1812
        %v1814 = vsel %vm1668, %v1449, 0.0
        %v1815 = vadd.f32 %v1813, %v1814
        %v1816 = vsel %vm1668, %v1454, 0.0
        %v1817 = vadd.f32 %v1815, %v1816
        %v1818 = vsel %vm1668, %v1457, 0.0
        %v1819 = vadd.f32 %v1817, %v1818
        %v1820 = vsel %vm1668, %v1462, 0.0
        %v1821 = vadd.f32 %v1819, %v1820
        %v1822 = vsel %vm1668, %v1465, 0.0
        %v1823 = vadd.f32 %v1821, %v1822
        %v1824 = vsel %vm1668, %v1470, 0.0
        %v1825 = vadd.f32 %v1823, %v1824
        %v1826 = vsel %vm1668, %v1473, 0.0
        %v1827 = vadd.f32 %v1825, %v1826
        %v1828 = vsel %vm1668, %v1478, 0.0
        %v1829 = vadd.f32 %v1827, %v1828
        %v1830 = vsel %vm1668, %v1481, 0.0
        %v1831 = vadd.f32 %v1829, %v1830
        %v1832 = vsel %vm1668, %v1486, 0.0
        %v1833 = vadd.f32 %v1831, %v1832
        %v1834 = vsel %vm1668, %v1489, 0.0
        %v1835 = vadd.f32 %v1833, %v1834
        %v1836 = vsel %vm1668, %v1494, 0.0
        %v1837 = vadd.f32 %v1835, %v1836
        %v1838 = vsel %vm1668, %v1497, 0.0
        %v1839 = vadd.f32 %v1837, %v1838
        %v1840 = vsel %vm1668, %v1502, 0.0
        %v1841 = vadd.f32 %v1839, %v1840
        %v1842 = vsel %vm1668, %v1505, 0.0
        %v1843 = vadd.f32 %v1841, %v1842
        %v1844 = vsel %vm1668, %v1510, 0.0
        %v1845 = vadd.f32 %v1843, %v1844
        %v1846 = vsel %vm1668, %v1513, 0.0
        %v1847 = vadd.f32 %v1845, %v1846
        %v1848 = vsel %vm1668, %v1518, 0.0
        %v1849 = vadd.f32 %v1847, %v1848
        %v1850 = vsel %vm1668, %v1521, 0.0
        %v1851 = vadd.f32 %v1849, %v1850
        %v1852 = vsel %vm1668, %v1526, 0.0
        %v1853 = vadd.f32 %v1851, %v1852
        %v1854 = vsel %vm1668, %v1529, 0.0
        %v1855 = vadd.f32 %v1853, %v1854
        %v1856 = vsel %vm1668, %v1534, 0.0
        %v1857 = vadd.f32 %v1855, %v1856
        %v1858 = vsel %vm1668, %v1537, 0.0
        %v1859 = vadd.f32 %v1857, %v1858
        %v1860 = vsel %vm1668, %v1542, 0.0
        %v1861 = vadd.f32 %v1859, %v1860
        %v1862 = vsel %vm1668, %v1545, 0.0
        %v1863 = vadd.f32 %v1861, %v1862
        %v1864 = vsel %vm1668, %v1550, 0.0
        %v1865 = vadd.f32 %v1863, %v1864
        %v1866 = vsel %vm1668, %v1553, 0.0
        %v1867 = vadd.f32 %v1865, %v1866
        %v1868 = vsel %vm1668, %v1558, 0.0
        %v1869 = vadd.f32 %v1867, %v1868
        %v1870 = vsel %vm1668, %v1561, 0.0
        %v1871 = vadd.f32 %v1869, %v1870
        %v1872 = vsel %vm1668, %v1566, 0.0
        %v1873 = vadd.f32 %v1871, %v1872
        %v1874 = vsel %vm1668, %v1569, 0.0
        %v1875 = vadd.f32 %v1873, %v1874
        %v1876 = vsel %vm1668, %v1574, 0.0
        %v1877 = vadd.f32 %v1875, %v1876
        %v1878 = vsel %vm1668, %v1577, 0.0
        %v1879 = vadd.f32 %v1877, %v1878
        %v1880 = vsel %vm1668, %v1582, 0.0
        %v1881 = vadd.f32 %v1879, %v1880
        %v1882 = vsel %vm1668, %v1585, 0.0
        %v1883 = vadd.f32 %v1881, %v1882
        %v1884 = vsel %vm1668, %v1590, 0.0
        %v1885 = vadd.f32 %v1883, %v1884
        %v1886 = vsel %vm1668, %v1593, 0.0
        %v1887 = vadd.f32 %v1885, %v1886
        %v1888 = vsel %vm1668, %v1598, 0.0
        %v1889 = vadd.f32 %v1887, %v1888
        %v1890 = vsel %vm1668, %v1601, 0.0
        %v1891 = vadd.f32 %v1889, %v1890
        %v1892 = vsel %vm1668, %v1606, 0.0
        %v1893 = vadd.f32 %v1891, %v1892
        %v1894 = vsel %vm1668, %v1609, 0.0
        %v1895 = vadd.f32 %v1893, %v1894
        %v1896 = vsel %vm1668, %v1614, 0.0
        %v1897 = vadd.f32 %v1895, %v1896
        %v1898 = vsel %vm1668, %v1617, 0.0
        %v1899 = vadd.f32 %v1897, %v1898
        %v1900 = vsel %vm1668, %v1622, 0.0
        %v1901 = vadd.f32 %v1899, %v1900
        %v1902 = vsel %vm1668, %v1625, 0.0
        %v1903 = vadd.f32 %v1901, %v1902
        %v1904 = vsel %vm1668, %v1630, 0.0
        %v1905 = vadd.f32 %v1903, %v1904
        %v1906 = vsel %vm1668, %v1633, 0.0
        %v1907 = vadd.f32 %v1905, %v1906
        %v1908 = vsel %vm1668, %v1638, 0.0
        %v1909 = vadd.f32 %v1907, %v1908
        %v1910 = vsel %vm1668, %v1641, 0.0
        %v1911 = vadd.f32 %v1909, %v1910
        %v1912 = vsel %vm1668, %v1646, 0.0
        %v1913 = vadd.f32 %v1911, %v1912
        %v1914 = vsel %vm1668, %v1649, 0.0
        %v1915 = vadd.f32 %v1913, %v1914
        %v1916 = vsel %vm1668, %v1654, 0.0
        %v1917 = vadd.f32 %v1915, %v1916
        %v1918 = vsel %vm1668, %v1657, 0.0
        %v1919 = vadd.f32 %v1917, %v1918
        %v1920 = vsel %vm1668, %v1662, 0.0
        %v1921 = vadd.f32 %v1919, %v1920
        %v1922 = vsel %vm1668, %v1665, 0.0
        %v1923 = vadd.f32 %v1921, %v1922
        %v1924 = vrot.slane %v1923, 4
        %v1925 = vadd.f32 %v1923, %v1924
        %v1926 = vrot.slane %v1925, 2
        %v1927 = vadd.f32 %v1925, %v1926
        %v1928 = vrot.slane %v1927, 1
        %v1929 = vadd.f32 %v1927, %v1928
        %v1930 = vrcp.pop 1024.0
        %v1931 = vmul.f32 %v1929, %v1930
        %v1932 = vsub.f32 %v1158, %v1931
        %v1933 = vsub.f32 %v1161, %v1931
        %v1934 = vsub.f32 %v1166, %v1931
        %v1935 = vsub.f32 %v1169, %v1931
        %v1936 = vsub.f32 %v1174, %v1931
        %v1937 = vsub.f32 %v1177, %v1931
        %v1938 = vsub.f32 %v1182, %v1931
        %v1939 = vsub.f32 %v1185, %v1931
        %v1940 = vsub.f32 %v1190, %v1931
        %v1941 = vsub.f32 %v1193, %v1931
        %v1942 = vsub.f32 %v1198, %v1931
        %v1943 = vsub.f32 %v1201, %v1931
        %v1944 = vsub.f32 %v1206, %v1931
        %v1945 = vsub.f32 %v1209, %v1931
        %v1946 = vsub.f32 %v1214, %v1931
        %v1947 = vsub.f32 %v1217, %v1931
        %v1948 = vsub.f32 %v1222, %v1931
        %v1949 = vsub.f32 %v1225, %v1931
        %v1950 = vsub.f32 %v1230, %v1931
        %v1951 = vsub.f32 %v1233, %v1931
        %v1952 = vsub.f32 %v1238, %v1931
        %v1953 = vsub.f32 %v1241, %v1931
        %v1954 = vsub.f32 %v1246, %v1931
        %v1955 = vsub.f32 %v1249, %v1931
        %v1956 = vsub.f32 %v1254, %v1931
        %v1957 = vsub.f32 %v1257, %v1931
        %v1958 = vsub.f32 %v1262, %v1931
        %v1959 = vsub.f32 %v1265, %v1931
        %v1960 = vsub.f32 %v1270, %v1931
        %v1961 = vsub.f32 %v1273, %v1931
        %v1962 = vsub.f32 %v1278, %v1931
        %v1963 = vsub.f32 %v1281, %v1931
        %v1964 = vsub.f32 %v1286, %v1931
        %v1965 = vsub.f32 %v1289, %v1931
        %v1966 = vsub.f32 %v1294, %v1931
        %v1967 = vsub.f32 %v1297, %v1931
        %v1968 = vsub.f32 %v1302, %v1931
        %v1969 = vsub.f32 %v1305, %v1931
        %v1970 = vsub.f32 %v1310, %v1931
        %v1971 = vsub.f32 %v1313, %v1931
        %v1972 = vsub.f32 %v1318, %v1931
        %v1973 = vsub.f32 %v1321, %v1931
        %v1974 = vsub.f32 %v1326, %v1931
        %v1975 = vsub.f32 %v1329, %v1931
        %v1976 = vsub.f32 %v1334, %v1931
        %v1977 = vsub.f32 %v1337, %v1931
        %v1978 = vsub.f32 %v1342, %v1931
        %v1979 = vsub.f32 %v1345, %v1931
        %v1980 = vsub.f32 %v1350, %v1931
        %v1981 = vsub.f32 %v1353, %v1931
        %v1982 = vsub.f32 %v1358, %v1931
        %v1983 = vsub.f32 %v1361, %v1931
        %v1984 = vsub.f32 %v1366, %v1931
        %v1985 = vsub.f32 %v1369, %v1931
        %v1986 = vsub.f32 %v1374, %v1931
        %v1987 = vsub.f32 %v1377, %v1931
        %v1988 = vsub.f32 %v1382, %v1931
        %v1989 = vsub.f32 %v1385, %v1931
        %v1990 = vsub.f32 %v1390, %v1931
        %v1991 = vsub.f32 %v1393, %v1931
        %v1992 = vsub.f32 %v1398, %v1931
        %v1993 = vsub.f32 %v1401, %v1931
        %v1994 = vsub.f32 %v1406, %v1931
        %v1995 = vsub.f32 %v1409, %v1931
        %v1996 = vsub.f32 %v1414, %v1931
        %v1997 = vsub.f32 %v1417, %v1931
        %v1998 = vsub.f32 %v1422, %v1931
        %v1999 = vsub.f32 %v1425, %v1931
        %v2000 = vsub.f32 %v1430, %v1931
        %v2001 = vsub.f32 %v1433, %v1931
        %v2002 = vsub.f32 %v1438, %v1931
        %v2003 = vsub.f32 %v1441, %v1931
        %v2004 = vsub.f32 %v1446, %v1931
        %v2005 = vsub.f32 %v1449, %v1931
        %v2006 = vsub.f32 %v1454, %v1931
        %v2007 = vsub.f32 %v1457, %v1931
        %v2008 = vsub.f32 %v1462, %v1931
        %v2009 = vsub.f32 %v1465, %v1931
        %v2010 = vsub.f32 %v1470, %v1931
        %v2011 = vsub.f32 %v1473, %v1931
        %v2012 = vsub.f32 %v1478, %v1931
        %v2013 = vsub.f32 %v1481, %v1931
        %v2014 = vsub.f32 %v1486, %v1931
        %v2015 = vsub.f32 %v1489, %v1931
        %v2016 = vsub.f32 %v1494, %v1931
        %v2017 = vsub.f32 %v1497, %v1931
        %v2018 = vsub.f32 %v1502, %v1931
        %v2019 = vsub.f32 %v1505, %v1931
        %v2020 = vsub.f32 %v1510, %v1931
        %v2021 = vsub.f32 %v1513, %v1931
        %v2022 = vsub.f32 %v1518, %v1931
        %v2023 = vsub.f32 %v1521, %v1931
        %v2024 = vsub.f32 %v1526, %v1931
        %v2025 = vsub.f32 %v1529, %v1931
        %v2026 = vsub.f32 %v1534, %v1931
        %v2027 = vsub.f32 %v1537, %v1931
        %v2028 = vsub.f32 %v1542, %v1931
        %v2029 = vsub.f32 %v1545, %v1931
        %v2030 = vsub.f32 %v1550, %v1931
        %v2031 = vsub.f32 %v1553, %v1931
        %v2032 = vsub.f32 %v1558, %v1931
        %v2033 = vsub.f32 %v1561, %v1931
        %v2034 = vsub.f32 %v1566, %v1931
        %v2035 = vsub.f32 %v1569, %v1931
        %v2036 = vsub.f32 %v1574, %v1931
        %v2037 = vsub.f32 %v1577, %v1931
        %v2038 = vsub.f32 %v1582, %v1931
        %v2039 = vsub.f32 %v1585, %v1931
        %v2040 = vsub.f32 %v1590, %v1931
        %v2041 = vsub.f32 %v1593, %v1931
        %v2042 = vsub.f32 %v1598, %v1931
        %v2043 = vsub.f32 %v1601, %v1931
        %v2044 = vsub.f32 %v1606, %v1931
        %v2045 = vsub.f32 %v1609, %v1931
        %v2046 = vsub.f32 %v1614, %v1931
        %v2047 = vsub.f32 %v1617, %v1931
        %v2048 = vsub.f32 %v1622, %v1931
        %v2049 = vsub.f32 %v1625, %v1931
        %v2050 = vsub.f32 %v1630, %v1931
        %v2051 = vsub.f32 %v1633, %v1931
        %v2052 = vsub.f32 %v1638, %v1931
        %v2053 = vsub.f32 %v1641, %v1931
        %v2054 = vsub.f32 %v1646, %v1931
        %v2055 = vsub.f32 %v1649, %v1931
        %v2056 = vsub.f32 %v1654, %v1931
        %v2057 = vsub.f32 %v1657, %v1931
        %v2058 = vsub.f32 %v1662, %v1931
        %v2059 = vsub.f32 %v1665, %v1931
        %v2060 = vmul.f32 %v1932, %v1932
        %v2061 = vmul.f32 %v1933, %v1933
        %v2062 = vmul.f32 %v1934, %v1934
        %v2063 = vmul.f32 %v1935, %v1935
        %v2064 = vmul.f32 %v1936, %v1936
        %v2065 = vmul.f32 %v1937, %v1937
        %v2066 = vmul.f32 %v1938, %v1938
        %v2067 = vmul.f32 %v1939, %v1939
        %v2068 = vmul.f32 %v1940, %v1940
        %v2069 = vmul.f32 %v1941, %v1941
        %v2070 = vmul.f32 %v1942, %v1942
        %v2071 = vmul.f32 %v1943, %v1943
        %v2072 = vmul.f32 %v1944, %v1944
        %v2073 = vmul.f32 %v1945, %v1945
        %v2074 = vmul.f32 %v1946, %v1946
        %v2075 = vmul.f32 %v1947, %v1947
        %v2076 = vmul.f32 %v1948, %v1948
        %v2077 = vmul.f32 %v1949, %v1949
        %v2078 = vmul.f32 %v1950, %v1950
        %v2079 = vmul.f32 %v1951, %v1951
        %v2080 = vmul.f32 %v1952, %v1952
        %v2081 = vmul.f32 %v1953, %v1953
        %v2082 = vmul.f32 %v1954, %v1954
        %v2083 = vmul.f32 %v1955, %v1955
        %v2084 = vmul.f32 %v1956, %v1956
        %v2085 = vmul.f32 %v1957, %v1957
        %v2086 = vmul.f32 %v1958, %v1958
        %v2087 = vmul.f32 %v1959, %v1959
        %v2088 = vmul.f32 %v1960, %v1960
        %v2089 = vmul.f32 %v1961, %v1961
        %v2090 = vmul.f32 %v1962, %v1962
        %v2091 = vmul.f32 %v1963, %v1963
        %v2092 = vmul.f32 %v1964, %v1964
        %v2093 = vmul.f32 %v1965, %v1965
        %v2094 = vmul.f32 %v1966, %v1966
        %v2095 = vmul.f32 %v1967, %v1967
        %v2096 = vmul.f32 %v1968, %v1968
        %v2097 = vmul.f32 %v1969, %v1969
        %v2098 = vmul.f32 %v1970, %v1970
        %v2099 = vmul.f32 %v1971, %v1971
        %v2100 = vmul.f32 %v1972, %v1972
        %v2101 = vmul.f32 %v1973, %v1973
        %v2102 = vmul.f32 %v1974, %v1974
        %v2103 = vmul.f32 %v1975, %v1975
        %v2104 = vmul.f32 %v1976, %v1976
        %v2105 = vmul.f32 %v1977, %v1977
        %v2106 = vmul.f32 %v1978, %v1978
        %v2107 = vmul.f32 %v1979, %v1979
        %v2108 = vmul.f32 %v1980, %v1980
        %v2109 = vmul.f32 %v1981, %v1981
        %v2110 = vmul.f32 %v1982, %v1982
        %v2111 = vmul.f32 %v1983, %v1983
        %v2112 = vmul.f32 %v1984, %v1984
        %v2113 = vmul.f32 %v1985, %v1985
        %v2114 = vmul.f32 %v1986, %v1986
        %v2115 = vmul.f32 %v1987, %v1987
        %v2116 = vmul.f32 %v1988, %v1988
        %v2117 = vmul.f32 %v1989, %v1989
        %v2118 = vmul.f32 %v1990, %v1990
        %v2119 = vmul.f32 %v1991, %v1991
        %v2120 = vmul.f32 %v1992, %v1992
        %v2121 = vmul.f32 %v1993, %v1993
        %v2122 = vmul.f32 %v1994, %v1994
        %v2123 = vmul.f32 %v1995, %v1995
        %v2124 = vmul.f32 %v1996, %v1996
        %v2125 = vmul.f32 %v1997, %v1997
        %v2126 = vmul.f32 %v1998, %v1998
        %v2127 = vmul.f32 %v1999, %v1999
        %v2128 = vmul.f32 %v2000, %v2000
        %v2129 = vmul.f32 %v2001, %v2001
        %v2130 = vmul.f32 %v2002, %v2002
        %v2131 = vmul.f32 %v2003, %v2003
        %v2132 = vmul.f32 %v2004, %v2004
        %v2133 = vmul.f32 %v2005, %v2005
        %v2134 = vmul.f32 %v2006, %v2006
        %v2135 = vmul.f32 %v2007, %v2007
        %v2136 = vmul.f32 %v2008, %v2008
        %v2137 = vmul.f32 %v2009, %v2009
        %v2138 = vmul.f32 %v2010, %v2010
        %v2139 = vmul.f32 %v2011, %v2011
        %v2140 = vmul.f32 %v2012, %v2012
        %v2141 = vmul.f32 %v2013, %v2013
        %v2142 = vmul.f32 %v2014, %v2014
        %v2143 = vmul.f32 %v2015, %v2015
        %v2144 = vmul.f32 %v2016, %v2016
        %v2145 = vmul.f32 %v2017, %v2017
        %v2146 = vmul.f32 %v2018, %v2018
        %v2147 = vmul.f32 %v2019, %v2019
        %v2148 = vmul.f32 %v2020, %v2020
        %v2149 = vmul.f32 %v2021, %v2021
        %v2150 = vmul.f32 %v2022, %v2022
        %v2151 = vmul.f32 %v2023, %v2023
        %v2152 = vmul.f32 %v2024, %v2024
        %v2153 = vmul.f32 %v2025, %v2025
        %v2154 = vmul.f32 %v2026, %v2026
        %v2155 = vmul.f32 %v2027, %v2027
        %v2156 = vmul.f32 %v2028, %v2028
        %v2157 = vmul.f32 %v2029, %v2029
        %v2158 = vmul.f32 %v2030, %v2030
        %v2159 = vmul.f32 %v2031, %v2031
        %v2160 = vmul.f32 %v2032, %v2032
        %v2161 = vmul.f32 %v2033, %v2033
        %v2162 = vmul.f32 %v2034, %v2034
        %v2163 = vmul.f32 %v2035, %v2035
        %v2164 = vmul.f32 %v2036, %v2036
        %v2165 = vmul.f32 %v2037, %v2037
        %v2166 = vmul.f32 %v2038, %v2038
        %v2167 = vmul.f32 %v2039, %v2039
        %v2168 = vmul.f32 %v2040, %v2040
        %v2169 = vmul.f32 %v2041, %v2041
        %v2170 = vmul.f32 %v2042, %v2042
        %v2171 = vmul.f32 %v2043, %v2043
        %v2172 = vmul.f32 %v2044, %v2044
        %v2173 = vmul.f32 %v2045, %v2045
        %v2174 = vmul.f32 %v2046, %v2046
        %v2175 = vmul.f32 %v2047, %v2047
        %v2176 = vmul.f32 %v2048, %v2048
        %v2177 = vmul.f32 %v2049, %v2049
        %v2178 = vmul.f32 %v2050, %v2050
        %v2179 = vmul.f32 %v2051, %v2051
        %v2180 = vmul.f32 %v2052, %v2052
        %v2181 = vmul.f32 %v2053, %v2053
        %v2182 = vmul.f32 %v2054, %v2054
        %v2183 = vmul.f32 %v2055, %v2055
        %v2184 = vmul.f32 %v2056, %v2056
        %v2185 = vmul.f32 %v2057, %v2057
        %v2186 = vmul.f32 %v2058, %v2058
        %v2187 = vmul.f32 %v2059, %v2059
        %v2188 = vsel %vm1668, %v2060, 0.0
        %v2189 = vsel %vm1668, %v2061, 0.0
        %v2190 = vadd.f32 %v2188, %v2189
        %v2191 = vsel %vm1668, %v2062, 0.0
        %v2192 = vadd.f32 %v2190, %v2191
        %v2193 = vsel %vm1668, %v2063, 0.0
        %v2194 = vadd.f32 %v2192, %v2193
        %v2195 = vsel %vm1668, %v2064, 0.0
        %v2196 = vadd.f32 %v2194, %v2195
        %v2197 = vsel %vm1668, %v2065, 0.0
        %v2198 = vadd.f32 %v2196, %v2197
        %v2199 = vsel %vm1668, %v2066, 0.0
        %v2200 = vadd.f32 %v2198, %v2199
        %v2201 = vsel %vm1668, %v2067, 0.0
        %v2202 = vadd.f32 %v2200, %v2201
        %v2203 = vsel %vm1668, %v2068, 0.0
        %v2204 = vadd.f32 %v2202, %v2203
        %v2205 = vsel %vm1668, %v2069, 0.0
        %v2206 = vadd.f32 %v2204, %v2205
        %v2207 = vsel %vm1668, %v2070, 0.0
        %v2208 = vadd.f32 %v2206, %v2207
        %v2209 = vsel %vm1668, %v2071, 0.0
        %v2210 = vadd.f32 %v2208, %v2209
        %v2211 = vsel %vm1668, %v2072, 0.0
        %v2212 = vadd.f32 %v2210, %v2211
        %v2213 = vsel %vm1668, %v2073, 0.0
        %v2214 = vadd.f32 %v2212, %v2213
        %v2215 = vsel %vm1668, %v2074, 0.0
        %v2216 = vadd.f32 %v2214, %v2215
        %v2217 = vsel %vm1668, %v2075, 0.0
        %v2218 = vadd.f32 %v2216, %v2217
        %v2219 = vsel %vm1668, %v2076, 0.0
        %v2220 = vadd.f32 %v2218, %v2219
        %v2221 = vsel %vm1668, %v2077, 0.0
        %v2222 = vadd.f32 %v2220, %v2221
        %v2223 = vsel %vm1668, %v2078, 0.0
        %v2224 = vadd.f32 %v2222, %v2223
        %v2225 = vsel %vm1668, %v2079, 0.0
        %v2226 = vadd.f32 %v2224, %v2225
        %v2227 = vsel %vm1668, %v2080, 0.0
        %v2228 = vadd.f32 %v2226, %v2227
        %v2229 = vsel %vm1668, %v2081, 0.0
        %v2230 = vadd.f32 %v2228, %v2229
        %v2231 = vsel %vm1668, %v2082, 0.0
        %v2232 = vadd.f32 %v2230, %v2231
        %v2233 = vsel %vm1668, %v2083, 0.0
        %v2234 = vadd.f32 %v2232, %v2233
        %v2235 = vsel %vm1668, %v2084, 0.0
        %v2236 = vadd.f32 %v2234, %v2235
        %v2237 = vsel %vm1668, %v2085, 0.0
        %v2238 = vadd.f32 %v2236, %v2237
        %v2239 = vsel %vm1668, %v2086, 0.0
        %v2240 = vadd.f32 %v2238, %v2239
        %v2241 = vsel %vm1668, %v2087, 0.0
        %v2242 = vadd.f32 %v2240, %v2241
        %v2243 = vsel %vm1668, %v2088, 0.0
        %v2244 = vadd.f32 %v2242, %v2243
        %v2245 = vsel %vm1668, %v2089, 0.0
        %v2246 = vadd.f32 %v2244, %v2245
        %v2247 = vsel %vm1668, %v2090, 0.0
        %v2248 = vadd.f32 %v2246, %v2247
        %v2249 = vsel %vm1668, %v2091, 0.0
        %v2250 = vadd.f32 %v2248, %v2249
        %v2251 = vsel %vm1668, %v2092, 0.0
        %v2252 = vadd.f32 %v2250, %v2251
        %v2253 = vsel %vm1668, %v2093, 0.0
        %v2254 = vadd.f32 %v2252, %v2253
        %v2255 = vsel %vm1668, %v2094, 0.0
        %v2256 = vadd.f32 %v2254, %v2255
        %v2257 = vsel %vm1668, %v2095, 0.0
        %v2258 = vadd.f32 %v2256, %v2257
        %v2259 = vsel %vm1668, %v2096, 0.0
        %v2260 = vadd.f32 %v2258, %v2259
        %v2261 = vsel %vm1668, %v2097, 0.0
        %v2262 = vadd.f32 %v2260, %v2261
        %v2263 = vsel %vm1668, %v2098, 0.0
        %v2264 = vadd.f32 %v2262, %v2263
        %v2265 = vsel %vm1668, %v2099, 0.0
        %v2266 = vadd.f32 %v2264, %v2265
        %v2267 = vsel %vm1668, %v2100, 0.0
        %v2268 = vadd.f32 %v2266, %v2267
        %v2269 = vsel %vm1668, %v2101, 0.0
        %v2270 = vadd.f32 %v2268, %v2269
        %v2271 = vsel %vm1668, %v2102, 0.0
        %v2272 = vadd.f32 %v2270, %v2271
        %v2273 = vsel %vm1668, %v2103, 0.0
        %v2274 = vadd.f32 %v2272, %v2273
        %v2275 = vsel %vm1668, %v2104, 0.0
        %v2276 = vadd.f32 %v2274, %v2275
        %v2277 = vsel %vm1668, %v2105, 0.0
        %v2278 = vadd.f32 %v2276, %v2277
        %v2279 = vsel %vm1668, %v2106, 0.0
        %v2280 = vadd.f32 %v2278, %v2279
        %v2281 = vsel %vm1668, %v2107, 0.0
        %v2282 = vadd.f32 %v2280, %v2281
        %v2283 = vsel %vm1668, %v2108, 0.0
        %v2284 = vadd.f32 %v2282, %v2283
        %v2285 = vsel %vm1668, %v2109, 0.0
        %v2286 = vadd.f32 %v2284, %v2285
        %v2287 = vsel %vm1668, %v2110, 0.0
        %v2288 = vadd.f32 %v2286, %v2287
        %v2289 = vsel %vm1668, %v2111, 0.0
        %v2290 = vadd.f32 %v2288, %v2289
        %v2291 = vsel %vm1668, %v2112, 0.0
        %v2292 = vadd.f32 %v2290, %v2291
        %v2293 = vsel %vm1668, %v2113, 0.0
        %v2294 = vadd.f32 %v2292, %v2293
        %v2295 = vsel %vm1668, %v2114, 0.0
        %v2296 = vadd.f32 %v2294, %v2295
        %v2297 = vsel %vm1668, %v2115, 0.0
        %v2298 = vadd.f32 %v2296, %v2297
        %v2299 = vsel %vm1668, %v2116, 0.0
        %v2300 = vadd.f32 %v2298, %v2299
        %v2301 = vsel %vm1668, %v2117, 0.0
        %v2302 = vadd.f32 %v2300, %v2301
        %v2303 = vsel %vm1668, %v2118, 0.0
        %v2304 = vadd.f32 %v2302, %v2303
        %v2305 = vsel %vm1668, %v2119, 0.0
        %v2306 = vadd.f32 %v2304, %v2305
        %v2307 = vsel %vm1668, %v2120, 0.0
        %v2308 = vadd.f32 %v2306, %v2307
        %v2309 = vsel %vm1668, %v2121, 0.0
        %v2310 = vadd.f32 %v2308, %v2309
        %v2311 = vsel %vm1668, %v2122, 0.0
        %v2312 = vadd.f32 %v2310, %v2311
        %v2313 = vsel %vm1668, %v2123, 0.0
        %v2314 = vadd.f32 %v2312, %v2313
        %v2315 = vsel %vm1668, %v2124, 0.0
        %v2316 = vadd.f32 %v2314, %v2315
        %v2317 = vsel %vm1668, %v2125, 0.0
        %v2318 = vadd.f32 %v2316, %v2317
        %v2319 = vsel %vm1668, %v2126, 0.0
        %v2320 = vadd.f32 %v2318, %v2319
        %v2321 = vsel %vm1668, %v2127, 0.0
        %v2322 = vadd.f32 %v2320, %v2321
        %v2323 = vsel %vm1668, %v2128, 0.0
        %v2324 = vadd.f32 %v2322, %v2323
        %v2325 = vsel %vm1668, %v2129, 0.0
        %v2326 = vadd.f32 %v2324, %v2325
        %v2327 = vsel %vm1668, %v2130, 0.0
        %v2328 = vadd.f32 %v2326, %v2327
        %v2329 = vsel %vm1668, %v2131, 0.0
        %v2330 = vadd.f32 %v2328, %v2329
        %v2331 = vsel %vm1668, %v2132, 0.0
        %v2332 = vadd.f32 %v2330, %v2331
        %v2333 = vsel %vm1668, %v2133, 0.0
        %v2334 = vadd.f32 %v2332, %v2333
        %v2335 = vsel %vm1668, %v2134, 0.0
        %v2336 = vadd.f32 %v2334, %v2335
        %v2337 = vsel %vm1668, %v2135, 0.0
        %v2338 = vadd.f32 %v2336, %v2337
        %v2339 = vsel %vm1668, %v2136, 0.0
        %v2340 = vadd.f32 %v2338, %v2339
        %v2341 = vsel %vm1668, %v2137, 0.0
        %v2342 = vadd.f32 %v2340, %v2341
        %v2343 = vsel %vm1668, %v2138, 0.0
        %v2344 = vadd.f32 %v2342, %v2343
        %v2345 = vsel %vm1668, %v2139, 0.0
        %v2346 = vadd.f32 %v2344, %v2345
        %v2347 = vsel %vm1668, %v2140, 0.0
        %v2348 = vadd.f32 %v2346, %v2347
        %v2349 = vsel %vm1668, %v2141, 0.0
        %v2350 = vadd.f32 %v2348, %v2349
        %v2351 = vsel %vm1668, %v2142, 0.0
        %v2352 = vadd.f32 %v2350, %v2351
        %v2353 = vsel %vm1668, %v2143, 0.0
        %v2354 = vadd.f32 %v2352, %v2353
        %v2355 = vsel %vm1668, %v2144, 0.0
        %v2356 = vadd.f32 %v2354, %v2355
        %v2357 = vsel %vm1668, %v2145, 0.0
        %v2358 = vadd.f32 %v2356, %v2357
        %v2359 = vsel %vm1668, %v2146, 0.0
        %v2360 = vadd.f32 %v2358, %v2359
        %v2361 = vsel %vm1668, %v2147, 0.0
        %v2362 = vadd.f32 %v2360, %v2361
        %v2363 = vsel %vm1668, %v2148, 0.0
        %v2364 = vadd.f32 %v2362, %v2363
        %v2365 = vsel %vm1668, %v2149, 0.0
        %v2366 = vadd.f32 %v2364, %v2365
        %v2367 = vsel %vm1668, %v2150, 0.0
        %v2368 = vadd.f32 %v2366, %v2367
        %v2369 = vsel %vm1668, %v2151, 0.0
        %v2370 = vadd.f32 %v2368, %v2369
        %v2371 = vsel %vm1668, %v2152, 0.0
        %v2372 = vadd.f32 %v2370, %v2371
        %v2373 = vsel %vm1668, %v2153, 0.0
        %v2374 = vadd.f32 %v2372, %v2373
        %v2375 = vsel %vm1668, %v2154, 0.0
        %v2376 = vadd.f32 %v2374, %v2375
        %v2377 = vsel %vm1668, %v2155, 0.0
        %v2378 = vadd.f32 %v2376, %v2377
        %v2379 = vsel %vm1668, %v2156, 0.0
        %v2380 = vadd.f32 %v2378, %v2379
        %v2381 = vsel %vm1668, %v2157, 0.0
        %v2382 = vadd.f32 %v2380, %v2381
        %v2383 = vsel %vm1668, %v2158, 0.0
        %v2384 = vadd.f32 %v2382, %v2383
        %v2385 = vsel %vm1668, %v2159, 0.0
        %v2386 = vadd.f32 %v2384, %v2385
        %v2387 = vsel %vm1668, %v2160, 0.0
        %v2388 = vadd.f32 %v2386, %v2387
        %v2389 = vsel %vm1668, %v2161, 0.0
        %v2390 = vadd.f32 %v2388, %v2389
        %v2391 = vsel %vm1668, %v2162, 0.0
        %v2392 = vadd.f32 %v2390, %v2391
        %v2393 = vsel %vm1668, %v2163, 0.0
        %v2394 = vadd.f32 %v2392, %v2393
        %v2395 = vsel %vm1668, %v2164, 0.0
        %v2396 = vadd.f32 %v2394, %v2395
        %v2397 = vsel %vm1668, %v2165, 0.0
        %v2398 = vadd.f32 %v2396, %v2397
        %v2399 = vsel %vm1668, %v2166, 0.0
        %v2400 = vadd.f32 %v2398, %v2399
        %v2401 = vsel %vm1668, %v2167, 0.0
        %v2402 = vadd.f32 %v2400, %v2401
        %v2403 = vsel %vm1668, %v2168, 0.0
        %v2404 = vadd.f32 %v2402, %v2403
        %v2405 = vsel %vm1668, %v2169, 0.0
        %v2406 = vadd.f32 %v2404, %v2405
        %v2407 = vsel %vm1668, %v2170, 0.0
        %v2408 = vadd.f32 %v2406, %v2407
        %v2409 = vsel %vm1668, %v2171, 0.0
        %v2410 = vadd.f32 %v2408, %v2409
        %v2411 = vsel %vm1668, %v2172, 0.0
        %v2412 = vadd.f32 %v2410, %v2411
        %v2413 = vsel %vm1668, %v2173, 0.0
        %v2414 = vadd.f32 %v2412, %v2413
        %v2415 = vsel %vm1668, %v2174, 0.0
        %v2416 = vadd.f32 %v2414, %v2415
        %v2417 = vsel %vm1668, %v2175, 0.0
        %v2418 = vadd.f32 %v2416, %v2417
        %v2419 = vsel %vm1668, %v2176, 0.0
        %v2420 = vadd.f32 %v2418, %v2419
        %v2421 = vsel %vm1668, %v2177, 0.0
        %v2422 = vadd.f32 %v2420, %v2421
        %v2423 = vsel %vm1668, %v2178, 0.0
        %v2424 = vadd.f32 %v2422, %v2423
        %v2425 = vsel %vm1668, %v2179, 0.0
        %v2426 = vadd.f32 %v2424, %v2425
        %v2427 = vsel %vm1668, %v2180, 0.0
        %v2428 = vadd.f32 %v2426, %v2427
        %v2429 = vsel %vm1668, %v2181, 0.0
        %v2430 = vadd.f32 %v2428, %v2429
        %v2431 = vsel %vm1668, %v2182, 0.0
        %v2432 = vadd.f32 %v2430, %v2431
        %v2433 = vsel %vm1668, %v2183, 0.0
        %v2434 = vadd.f32 %v2432, %v2433
        %v2435 = vsel %vm1668, %v2184, 0.0
        %v2436 = vadd.f32 %v2434, %v2435
        %v2437 = vsel %vm1668, %v2185, 0.0
        %v2438 = vadd.f32 %v2436, %v2437
        %v2439 = vsel %vm1668, %v2186, 0.0
        %v2440 = vadd.f32 %v2438, %v2439
        %v2441 = vsel %vm1668, %v2187, 0.0
        %v2442 = vadd.f32 %v2440, %v2441
        %v2443 = vrot.slane %v2442, 4
        %v2444 = vadd.f32 %v2442, %v2443
        %v2445 = vrot.slane %v2444, 2
        %v2446 = vadd.f32 %v2444, %v2445
        %v2447 = vrot.slane %v2446, 1
        %v2448 = vadd.f32 %v2446, %v2447
        %v2449 = vmul.f32 %v2448, %v1930
        %v2450 = vadd.f32 %v2449, 1e-05
        %v2451 = vrsqrt.pop %v2450
        %v2452 = vmul.f32 %v1932, %v2451
        %v2453 = vmul.f32 %v1933, %v2451
        %v2454 = vmul.f32 %v1934, %v2451
        %v2455 = vmul.f32 %v1935, %v2451
        %v2456 = vmul.f32 %v1936, %v2451
        %v2457 = vmul.f32 %v1937, %v2451
        %v2458 = vmul.f32 %v1938, %v2451
        %v2459 = vmul.f32 %v1939, %v2451
        %v2460 = vmul.f32 %v1940, %v2451
        %v2461 = vmul.f32 %v1941, %v2451
        %v2462 = vmul.f32 %v1942, %v2451
        %v2463 = vmul.f32 %v1943, %v2451
        %v2464 = vmul.f32 %v1944, %v2451
        %v2465 = vmul.f32 %v1945, %v2451
        %v2466 = vmul.f32 %v1946, %v2451
        %v2467 = vmul.f32 %v1947, %v2451
        %v2468 = vmul.f32 %v1948, %v2451
        %v2469 = vmul.f32 %v1949, %v2451
        %v2470 = vmul.f32 %v1950, %v2451
        %v2471 = vmul.f32 %v1951, %v2451
        %v2472 = vmul.f32 %v1952, %v2451
        %v2473 = vmul.f32 %v1953, %v2451
        %v2474 = vmul.f32 %v1954, %v2451
        %v2475 = vmul.f32 %v1955, %v2451
        %v2476 = vmul.f32 %v1956, %v2451
        %v2477 = vmul.f32 %v1957, %v2451
        %v2478 = vmul.f32 %v1958, %v2451
        %v2479 = vmul.f32 %v1959, %v2451
        %v2480 = vmul.f32 %v1960, %v2451
        %v2481 = vmul.f32 %v1961, %v2451
        %v2482 = vmul.f32 %v1962, %v2451
        %v2483 = vmul.f32 %v1963, %v2451
        %v2484 = vmul.f32 %v1964, %v2451
        %v2485 = vmul.f32 %v1965, %v2451
        %v2486 = vmul.f32 %v1966, %v2451
        %v2487 = vmul.f32 %v1967, %v2451
        %v2488 = vmul.f32 %v1968, %v2451
        %v2489 = vmul.f32 %v1969, %v2451
        %v2490 = vmul.f32 %v1970, %v2451
        %v2491 = vmul.f32 %v1971, %v2451
        %v2492 = vmul.f32 %v1972, %v2451
        %v2493 = vmul.f32 %v1973, %v2451
        %v2494 = vmul.f32 %v1974, %v2451
        %v2495 = vmul.f32 %v1975, %v2451
        %v2496 = vmul.f32 %v1976, %v2451
        %v2497 = vmul.f32 %v1977, %v2451
        %v2498 = vmul.f32 %v1978, %v2451
        %v2499 = vmul.f32 %v1979, %v2451
        %v2500 = vmul.f32 %v1980, %v2451
        %v2501 = vmul.f32 %v1981, %v2451
        %v2502 = vmul.f32 %v1982, %v2451
        %v2503 = vmul.f32 %v1983, %v2451
        %v2504 = vmul.f32 %v1984, %v2451
        %v2505 = vmul.f32 %v1985, %v2451
        %v2506 = vmul.f32 %v1986, %v2451
        %v2507 = vmul.f32 %v1987, %v2451
        %v2508 = vmul.f32 %v1988, %v2451
        %v2509 = vmul.f32 %v1989, %v2451
        %v2510 = vmul.f32 %v1990, %v2451
        %v2511 = vmul.f32 %v1991, %v2451
        %v2512 = vmul.f32 %v1992, %v2451
        %v2513 = vmul.f32 %v1993, %v2451
        %v2514 = vmul.f32 %v1994, %v2451
        %v2515 = vmul.f32 %v1995, %v2451
        %v2516 = vmul.f32 %v1996, %v2451
        %v2517 = vmul.f32 %v1997, %v2451
        %v2518 = vmul.f32 %v1998, %v2451
        %v2519 = vmul.f32 %v1999, %v2451
        %v2520 = vmul.f32 %v2000, %v2451
        %v2521 = vmul.f32 %v2001, %v2451
        %v2522 = vmul.f32 %v2002, %v2451
        %v2523 = vmul.f32 %v2003, %v2451
        %v2524 = vmul.f32 %v2004, %v2451
        %v2525 = vmul.f32 %v2005, %v2451
        %v2526 = vmul.f32 %v2006, %v2451
        %v2527 = vmul.f32 %v2007, %v2451
        %v2528 = vmul.f32 %v2008, %v2451
        %v2529 = vmul.f32 %v2009, %v2451
        %v2530 = vmul.f32 %v2010, %v2451
        %v2531 = vmul.f32 %v2011, %v2451
        %v2532 = vmul.f32 %v2012, %v2451
        %v2533 = vmul.f32 %v2013, %v2451
        %v2534 = vmul.f32 %v2014, %v2451
        %v2535 = vmul.f32 %v2015, %v2451
        %v2536 = vmul.f32 %v2016, %v2451
        %v2537 = vmul.f32 %v2017, %v2451
        %v2538 = vmul.f32 %v2018, %v2451
        %v2539 = vmul.f32 %v2019, %v2451
        %v2540 = vmul.f32 %v2020, %v2451
        %v2541 = vmul.f32 %v2021, %v2451
        %v2542 = vmul.f32 %v2022, %v2451
        %v2543 = vmul.f32 %v2023, %v2451
        %v2544 = vmul.f32 %v2024, %v2451
        %v2545 = vmul.f32 %v2025, %v2451
        %v2546 = vmul.f32 %v2026, %v2451
        %v2547 = vmul.f32 %v2027, %v2451
        %v2548 = vmul.f32 %v2028, %v2451
        %v2549 = vmul.f32 %v2029, %v2451
        %v2550 = vmul.f32 %v2030, %v2451
        %v2551 = vmul.f32 %v2031, %v2451
        %v2552 = vmul.f32 %v2032, %v2451
        %v2553 = vmul.f32 %v2033, %v2451
        %v2554 = vmul.f32 %v2034, %v2451
        %v2555 = vmul.f32 %v2035, %v2451
        %v2556 = vmul.f32 %v2036, %v2451
        %v2557 = vmul.f32 %v2037, %v2451
        %v2558 = vmul.f32 %v2038, %v2451
        %v2559 = vmul.f32 %v2039, %v2451
        %v2560 = vmul.f32 %v2040, %v2451
        %v2561 = vmul.f32 %v2041, %v2451
        %v2562 = vmul.f32 %v2042, %v2451
        %v2563 = vmul.f32 %v2043, %v2451
        %v2564 = vmul.f32 %v2044, %v2451
        %v2565 = vmul.f32 %v2045, %v2451
        %v2566 = vmul.f32 %v2046, %v2451
        %v2567 = vmul.f32 %v2047, %v2451
        %v2568 = vmul.f32 %v2048, %v2451
        %v2569 = vmul.f32 %v2049, %v2451
        %v2570 = vmul.f32 %v2050, %v2451
        %v2571 = vmul.f32 %v2051, %v2451
        %v2572 = vmul.f32 %v2052, %v2451
        %v2573 = vmul.f32 %v2053, %v2451
        %v2574 = vmul.f32 %v2054, %v2451
        %v2575 = vmul.f32 %v2055, %v2451
        %v2576 = vmul.f32 %v2056, %v2451
        %v2577 = vmul.f32 %v2057, %v2451
        %v2578 = vmul.f32 %v2058, %v2451
        %v2579 = vmul.f32 %v2059, %v2451
        %v2580 = vmax.f32 %v2452, 0.0
        %v2581 = vmax.f32 %v2453, 0.0
        %v2582 = vmax.f32 %v2454, 0.0
        %v2583 = vmax.f32 %v2455, 0.0
        %v2584 = vmax.f32 %v2456, 0.0
        %v2585 = vmax.f32 %v2457, 0.0
        %v2586 = vmax.f32 %v2458, 0.0
        %v2587 = vmax.f32 %v2459, 0.0
        %v2588 = vmax.f32 %v2460, 0.0
        %v2589 = vmax.f32 %v2461, 0.0
        %v2590 = vmax.f32 %v2462, 0.0
        %v2591 = vmax.f32 %v2463, 0.0
        %v2592 = vmax.f32 %v2464, 0.0
        %v2593 = vmax.f32 %v2465, 0.0
        %v2594 = vmax.f32 %v2466, 0.0
        %v2595 = vmax.f32 %v2467, 0.0
        %v2596 = vmax.f32 %v2468, 0.0
        %v2597 = vmax.f32 %v2469, 0.0
        %v2598 = vmax.f32 %v2470, 0.0
        %v2599 = vmax.f32 %v2471, 0.0
        %v2600 = vmax.f32 %v2472, 0.0
        %v2601 = vmax.f32 %v2473, 0.0
        %v2602 = vmax.f32 %v2474, 0.0
        %v2603 = vmax.f32 %v2475, 0.0
        %v2604 = vmax.f32 %v2476, 0.0
        %v2605 = vmax.f32 %v2477, 0.0
        %v2606 = vmax.f32 %v2478, 0.0
        %v2607 = vmax.f32 %v2479, 0.0
        %v2608 = vmax.f32 %v2480, 0.0
        %v2609 = vmax.f32 %v2481, 0.0
        %v2610 = vmax.f32 %v2482, 0.0
        %v2611 = vmax.f32 %v2483, 0.0
        %v2612 = vmax.f32 %v2484, 0.0
        %v2613 = vmax.f32 %v2485, 0.0
        %v2614 = vmax.f32 %v2486, 0.0
        %v2615 = vmax.f32 %v2487, 0.0
        %v2616 = vmax.f32 %v2488, 0.0
        %v2617 = vmax.f32 %v2489, 0.0
        %v2618 = vmax.f32 %v2490, 0.0
        %v2619 = vmax.f32 %v2491, 0.0
        %v2620 = vmax.f32 %v2492, 0.0
        %v2621 = vmax.f32 %v2493, 0.0
        %v2622 = vmax.f32 %v2494, 0.0
        %v2623 = vmax.f32 %v2495, 0.0
        %v2624 = vmax.f32 %v2496, 0.0
        %v2625 = vmax.f32 %v2497, 0.0
        %v2626 = vmax.f32 %v2498, 0.0
        %v2627 = vmax.f32 %v2499, 0.0
        %v2628 = vmax.f32 %v2500, 0.0
        %v2629 = vmax.f32 %v2501, 0.0
        %v2630 = vmax.f32 %v2502, 0.0
        %v2631 = vmax.f32 %v2503, 0.0
        %v2632 = vmax.f32 %v2504, 0.0
        %v2633 = vmax.f32 %v2505, 0.0
        %v2634 = vmax.f32 %v2506, 0.0
        %v2635 = vmax.f32 %v2507, 0.0
        %v2636 = vmax.f32 %v2508, 0.0
        %v2637 = vmax.f32 %v2509, 0.0
        %v2638 = vmax.f32 %v2510, 0.0
        %v2639 = vmax.f32 %v2511, 0.0
        %v2640 = vmax.f32 %v2512, 0.0
        %v2641 = vmax.f32 %v2513, 0.0
        %v2642 = vmax.f32 %v2514, 0.0
        %v2643 = vmax.f32 %v2515, 0.0
        %v2644 = vmax.f32 %v2516, 0.0
        %v2645 = vmax.f32 %v2517, 0.0
        %v2646 = vmax.f32 %v2518, 0.0
        %v2647 = vmax.f32 %v2519, 0.0
        %v2648 = vmax.f32 %v2520, 0.0
        %v2649 = vmax.f32 %v2521, 0.0
        %v2650 = vmax.f32 %v2522, 0.0
        %v2651 = vmax.f32 %v2523, 0.0
        %v2652 = vmax.f32 %v2524, 0.0
        %v2653 = vmax.f32 %v2525, 0.0
        %v2654 = vmax.f32 %v2526, 0.0
        %v2655 = vmax.f32 %v2527, 0.0
        %v2656 = vmax.f32 %v2528, 0.0
        %v2657 = vmax.f32 %v2529, 0.0
        %v2658 = vmax.f32 %v2530, 0.0
        %v2659 = vmax.f32 %v2531, 0.0
        %v2660 = vmax.f32 %v2532, 0.0
        %v2661 = vmax.f32 %v2533, 0.0
        %v2662 = vmax.f32 %v2534, 0.0
        %v2663 = vmax.f32 %v2535, 0.0
        %v2664 = vmax.f32 %v2536, 0.0
        %v2665 = vmax.f32 %v2537, 0.0
        %v2666 = vmax.f32 %v2538, 0.0
        %v2667 = vmax.f32 %v2539, 0.0
        %v2668 = vmax.f32 %v2540, 0.0
        %v2669 = vmax.f32 %v2541, 0.0
        %v2670 = vmax.f32 %v2542, 0.0
        %v2671 = vmax.f32 %v2543, 0.0
        %v2672 = vmax.f32 %v2544, 0.0
        %v2673 = vmax.f32 %v2545, 0.0
        %v2674 = vmax.f32 %v2546, 0.0
        %v2675 = vmax.f32 %v2547, 0.0
        %v2676 = vmax.f32 %v2548, 0.0
        %v2677 = vmax.f32 %v2549, 0.0
        %v2678 = vmax.f32 %v2550, 0.0
        %v2679 = vmax.f32 %v2551, 0.0
        %v2680 = vmax.f32 %v2552, 0.0
        %v2681 = vmax.f32 %v2553, 0.0
        %v2682 = vmax.f32 %v2554, 0.0
        %v2683 = vmax.f32 %v2555, 0.0
        %v2684 = vmax.f32 %v2556, 0.0
        %v2685 = vmax.f32 %v2557, 0.0
        %v2686 = vmax.f32 %v2558, 0.0
        %v2687 = vmax.f32 %v2559, 0.0
        %v2688 = vmax.f32 %v2560, 0.0
        %v2689 = vmax.f32 %v2561, 0.0
        %v2690 = vmax.f32 %v2562, 0.0
        %v2691 = vmax.f32 %v2563, 0.0
        %v2692 = vmax.f32 %v2564, 0.0
        %v2693 = vmax.f32 %v2565, 0.0
        %v2694 = vmax.f32 %v2566, 0.0
        %v2695 = vmax.f32 %v2567, 0.0
        %v2696 = vmax.f32 %v2568, 0.0
        %v2697 = vmax.f32 %v2569, 0.0
        %v2698 = vmax.f32 %v2570, 0.0
        %v2699 = vmax.f32 %v2571, 0.0
        %v2700 = vmax.f32 %v2572, 0.0
        %v2701 = vmax.f32 %v2573, 0.0
        %v2702 = vmax.f32 %v2574, 0.0
        %v2703 = vmax.f32 %v2575, 0.0
        %v2704 = vmax.f32 %v2576, 0.0
        %v2705 = vmax.f32 %v2577, 0.0
        %v2706 = vmax.f32 %v2578, 0.0
        %v2707 = vmax.f32 %v2579, 0.0
        %2708 = vst.msk [vmem:[%s136] sm:$0xff] %vm1668, %v2580
        %2709 = vst.msk [vmem:[%s136 + $0x8] sm:$0xff] %vm1668, %v2581
        %2710 = vst.msk [vmem:[%s136 + $0x10] sm:$0xff] %vm1668, %v2582
        %2711 = vst.msk [vmem:[%s136 + $0x18] sm:$0xff] %vm1668, %v2583
        %2712 = vst.msk [vmem:[%s136 + $0x20] sm:$0xff] %vm1668, %v2584
        %2713 = vst.msk [vmem:[%s136 + $0x28] sm:$0xff] %vm1668, %v2585
        %2714 = vst.msk [vmem:[%s136 + $0x30] sm:$0xff] %vm1668, %v2586
        %2715 = vst.msk [vmem:[%s136 + $0x38] sm:$0xff] %vm1668, %v2587
        %2716 = vst.msk [vmem:[%s136 + $0x40] sm:$0xff] %vm1668, %v2588
        %2717 = vst.msk [vmem:[%s136 + $0x48] sm:$0xff] %vm1668, %v2589
        %2718 = vst.msk [vmem:[%s136 + $0x50] sm:$0xff] %vm1668, %v2590
        %2719 = vst.msk [vmem:[%s136 + $0x58] sm:$0xff] %vm1668, %v2591
        %2720 = vst.msk [vmem:[%s136 + $0x60] sm:$0xff] %vm1668, %v2592
        %2721 = vst.msk [vmem:[%s136 + $0x68] sm:$0xff] %vm1668, %v2593
        %2722 = vst.msk [vmem:[%s136 + $0x70] sm:$0xff] %vm1668, %v2594
        %2723 = vst.msk [vmem:[%s136 + $0x78] sm:$0xff] %vm1668, %v2595
        %2724 = vst.msk [vmem:[%s136 + $0x80] sm:$0xff] %vm1668, %v2596
        %2725 = vst.msk [vmem:[%s136 + $0x88] sm:$0xff] %vm1668, %v2597
        %2726 = vst.msk [vmem:[%s136 + $0x90] sm:$0xff] %vm1668, %v2598
        %2727 = vst.msk [vmem:[%s136 + $0x98] sm:$0xff] %vm1668, %v2599
        %2728 = vst.msk [vmem:[%s136 + $0xa0] sm:$0xff] %vm1668, %v2600
        %2729 = vst.msk [vmem:[%s136 + $0xa8] sm:$0xff] %vm1668, %v2601
        %2730 = vst.msk [vmem:[%s136 + $0xb0] sm:$0xff] %vm1668, %v2602
        %2731 = vst.msk [vmem:[%s136 + $0xb8] sm:$0xff] %vm1668, %v2603
        %2732 = vst.msk [vmem:[%s136 + $0xc0] sm:$0xff] %vm1668, %v2604
        %2733 = vst.msk [vmem:[%s136 + $0xc8] sm:$0xff] %vm1668, %v2605
        %2734 = vst.msk [vmem:[%s136 + $0xd0] sm:$0xff] %vm1668, %v2606
        %2735 = vst.msk [vmem:[%s136 + $0xd8] sm:$0xff] %vm1668, %v2607
        %2736 = vst.msk [vmem:[%s136 + $0xe0] sm:$0xff] %vm1668, %v2608
        %2737 = vst.msk [vmem:[%s136 + $0xe8] sm:$0xff] %vm1668, %v2609
        %2738 = vst.msk [vmem:[%s136 + $0xf0] sm:$0xff] %vm1668, %v2610
        %2739 = vst.msk [vmem:[%s136 + $0xf8] sm:$0xff] %vm1668, %v2611
        %2740 = vst.msk [vmem:[%s136 + $0x100] sm:$0xff] %vm1668, %v2612
        %2741 = vst.msk [vmem:[%s136 + $0x108] sm:$0xff] %vm1668, %v2613
        %2742 = vst.msk [vmem:[%s136 + $0x110] sm:$0xff] %vm1668, %v2614
        %2743 = vst.msk [vmem:[%s136 + $0x118] sm:$0xff] %vm1668, %v2615
        %2744 = vst.msk [vmem:[%s136 + $0x120] sm:$0xff] %vm1668, %v2616
        %2745 = vst.msk [vmem:[%s136 + $0x128] sm:$0xff] %vm1668, %v2617
        %2746 = vst.msk [vmem:[%s136 + $0x130] sm:$0xff] %vm1668, %v2618
        %2747 = vst.msk [vmem:[%s136 + $0x138] sm:$0xff] %vm1668, %v2619
        %2748 = vst.msk [vmem:[%s136 + $0x140] sm:$0xff] %vm1668, %v2620
        %2749 = vst.msk [vmem:[%s136 + $0x148] sm:$0xff] %vm1668, %v2621
        %2750 = vst.msk [vmem:[%s136 + $0x150] sm:$0xff] %vm1668, %v2622
        %2751 = vst.msk [vmem:[%s136 + $0x158] sm:$0xff] %vm1668, %v2623
        %2752 = vst.msk [vmem:[%s136 + $0x160] sm:$0xff] %vm1668, %v2624
        %2753 = vst.msk [vmem:[%s136 + $0x168] sm:$0xff] %vm1668, %v2625
        %2754 = vst.msk [vmem:[%s136 + $0x170] sm:$0xff] %vm1668, %v2626
        %2755 = vst.msk [vmem:[%s136 + $0x178] sm:$0xff] %vm1668, %v2627
        %2756 = vst.msk [vmem:[%s136 + $0x180] sm:$0xff] %vm1668, %v2628
        %2757 = vst.msk [vmem:[%s136 + $0x188] sm:$0xff] %vm1668, %v2629
        %2758 = vst.msk [vmem:[%s136 + $0x190] sm:$0xff] %vm1668, %v2630
        %2759 = vst.msk [vmem:[%s136 + $0x198] sm:$0xff] %vm1668, %v2631
        %2760 = vst.msk [vmem:[%s136 + $0x1a0] sm:$0xff] %vm1668, %v2632
        %2761 = vst.msk [vmem:[%s136 + $0x1a8] sm:$0xff] %vm1668, %v2633
        %2762 = vst.msk [vmem:[%s136 + $0x1b0] sm:$0xff] %vm1668, %v2634
        %2763 = vst.msk [vmem:[%s136 + $0x1b8] sm:$0xff] %vm1668, %v2635
        %2764 = vst.msk [vmem:[%s136 + $0x1c0] sm:$0xff] %vm1668, %v2636
        %2765 = vst.msk [vmem:[%s136 + $0x1c8] sm:$0xff] %vm1668, %v2637
        %2766 = vst.msk [vmem:[%s136 + $0x1d0] sm:$0xff] %vm1668, %v2638
        %2767 = vst.msk [vmem:[%s136 + $0x1d8] sm:$0xff] %vm1668, %v2639
        %2768 = vst.msk [vmem:[%s136 + $0x1e0] sm:$0xff] %vm1668, %v2640
        %2769 = vst.msk [vmem:[%s136 + $0x1e8] sm:$0xff] %vm1668, %v2641
        %2770 = vst.msk [vmem:[%s136 + $0x1f0] sm:$0xff] %vm1668, %v2642
        %2771 = vst.msk [vmem:[%s136 + $0x1f8] sm:$0xff] %vm1668, %v2643
        %2772 = vst.msk [vmem:[%s136 + $0x200] sm:$0xff] %vm1668, %v2644
        %2773 = vst.msk [vmem:[%s136 + $0x208] sm:$0xff] %vm1668, %v2645
        %2774 = vst.msk [vmem:[%s136 + $0x210] sm:$0xff] %vm1668, %v2646
        %2775 = vst.msk [vmem:[%s136 + $0x218] sm:$0xff] %vm1668, %v2647
        %2776 = vst.msk [vmem:[%s136 + $0x220] sm:$0xff] %vm1668, %v2648
        %2777 = vst.msk [vmem:[%s136 + $0x228] sm:$0xff] %vm1668, %v2649
        %2778 = vst.msk [vmem:[%s136 + $0x230] sm:$0xff] %vm1668, %v2650
        %2779 = vst.msk [vmem:[%s136 + $0x238] sm:$0xff] %vm1668, %v2651
        %2780 = vst.msk [vmem:[%s136 + $0x240] sm:$0xff] %vm1668, %v2652
        %2781 = vst.msk [vmem:[%s136 + $0x248] sm:$0xff] %vm1668, %v2653
        %2782 = vst.msk [vmem:[%s136 + $0x250] sm:$0xff] %vm1668, %v2654
        %2783 = vst.msk [vmem:[%s136 + $0x258] sm:$0xff] %vm1668, %v2655
        %2784 = vst.msk [vmem:[%s136 + $0x260] sm:$0xff] %vm1668, %v2656
        %2785 = vst.msk [vmem:[%s136 + $0x268] sm:$0xff] %vm1668, %v2657
        %2786 = vst.msk [vmem:[%s136 + $0x270] sm:$0xff] %vm1668, %v2658
        %2787 = vst.msk [vmem:[%s136 + $0x278] sm:$0xff] %vm1668, %v2659
        %2788 = vst.msk [vmem:[%s136 + $0x280] sm:$0xff] %vm1668, %v2660
        %2789 = vst.msk [vmem:[%s136 + $0x288] sm:$0xff] %vm1668, %v2661
        %2790 = vst.msk [vmem:[%s136 + $0x290] sm:$0xff] %vm1668, %v2662
        %2791 = vst.msk [vmem:[%s136 + $0x298] sm:$0xff] %vm1668, %v2663
        %2792 = vst.msk [vmem:[%s136 + $0x2a0] sm:$0xff] %vm1668, %v2664
        %2793 = vst.msk [vmem:[%s136 + $0x2a8] sm:$0xff] %vm1668, %v2665
        %2794 = vst.msk [vmem:[%s136 + $0x2b0] sm:$0xff] %vm1668, %v2666
        %2795 = vst.msk [vmem:[%s136 + $0x2b8] sm:$0xff] %vm1668, %v2667
        %2796 = vst.msk [vmem:[%s136 + $0x2c0] sm:$0xff] %vm1668, %v2668
        %2797 = vst.msk [vmem:[%s136 + $0x2c8] sm:$0xff] %vm1668, %v2669
        %2798 = vst.msk [vmem:[%s136 + $0x2d0] sm:$0xff] %vm1668, %v2670
        %2799 = vst.msk [vmem:[%s136 + $0x2d8] sm:$0xff] %vm1668, %v2671
        %2800 = vst.msk [vmem:[%s136 + $0x2e0] sm:$0xff] %vm1668, %v2672
        %2801 = vst.msk [vmem:[%s136 + $0x2e8] sm:$0xff] %vm1668, %v2673
        %2802 = vst.msk [vmem:[%s136 + $0x2f0] sm:$0xff] %vm1668, %v2674
        %2803 = vst.msk [vmem:[%s136 + $0x2f8] sm:$0xff] %vm1668, %v2675
        %2804 = vst.msk [vmem:[%s136 + $0x300] sm:$0xff] %vm1668, %v2676
        %2805 = vst.msk [vmem:[%s136 + $0x308] sm:$0xff] %vm1668, %v2677
        %2806 = vst.msk [vmem:[%s136 + $0x310] sm:$0xff] %vm1668, %v2678
        %2807 = vst.msk [vmem:[%s136 + $0x318] sm:$0xff] %vm1668, %v2679
        %2808 = vst.msk [vmem:[%s136 + $0x320] sm:$0xff] %vm1668, %v2680
        %2809 = vst.msk [vmem:[%s136 + $0x328] sm:$0xff] %vm1668, %v2681
        %2810 = vst.msk [vmem:[%s136 + $0x330] sm:$0xff] %vm1668, %v2682
        %2811 = vst.msk [vmem:[%s136 + $0x338] sm:$0xff] %vm1668, %v2683
        %2812 = vst.msk [vmem:[%s136 + $0x340] sm:$0xff] %vm1668, %v2684
        %2813 = vst.msk [vmem:[%s136 + $0x348] sm:$0xff] %vm1668, %v2685
        %2814 = vst.msk [vmem:[%s136 + $0x350] sm:$0xff] %vm1668, %v2686
        %2815 = vst.msk [vmem:[%s136 + $0x358] sm:$0xff] %vm1668, %v2687
        %2816 = vst.msk [vmem:[%s136 + $0x360] sm:$0xff] %vm1668, %v2688
        %2817 = vst.msk [vmem:[%s136 + $0x368] sm:$0xff] %vm1668, %v2689
        %2818 = vst.msk [vmem:[%s136 + $0x370] sm:$0xff] %vm1668, %v2690
        %2819 = vst.msk [vmem:[%s136 + $0x378] sm:$0xff] %vm1668, %v2691
        %2820 = vst.msk [vmem:[%s136 + $0x380] sm:$0xff] %vm1668, %v2692
        %2821 = vst.msk [vmem:[%s136 + $0x388] sm:$0xff] %vm1668, %v2693
        %2822 = vst.msk [vmem:[%s136 + $0x390] sm:$0xff] %vm1668, %v2694
        %2823 = vst.msk [vmem:[%s136 + $0x398] sm:$0xff] %vm1668, %v2695
        %2824 = vst.msk [vmem:[%s136 + $0x3a0] sm:$0xff] %vm1668, %v2696
        %2825 = vst.msk [vmem:[%s136 + $0x3a8] sm:$0xff] %vm1668, %v2697
        %2826 = vst.msk [vmem:[%s136 + $0x3b0] sm:$0xff] %vm1668, %v2698
        %2827 = vst.msk [vmem:[%s136 + $0x3b8] sm:$0xff] %vm1668, %v2699
        %2828 = vst.msk [vmem:[%s136 + $0x3c0] sm:$0xff] %vm1668, %v2700
        %2829 = vst.msk [vmem:[%s136 + $0x3c8] sm:$0xff] %vm1668, %v2701
        %2830 = vst.msk [vmem:[%s136 + $0x3d0] sm:$0xff] %vm1668, %v2702
        %2831 = vst.msk [vmem:[%s136 + $0x3d8] sm:$0xff] %vm1668, %v2703
        %2832 = vst.msk [vmem:[%s136 + $0x3e0] sm:$0xff] %vm1668, %v2704
        %2833 = vst.msk [vmem:[%s136 + $0x3e8] sm:$0xff] %vm1668, %v2705
        %2834 = vst.msk [vmem:[%s136 + $0x3f0] sm:$0xff] %vm1668, %v2706
        %2835 = vst.msk [vmem:[%s136 + $0x3f8] sm:$0xff] %vm1668, %v2707
        %s2836 = sand.u32 %s71, 1
        %s2837 = scalar_lea.sflag [#allocation3], %s2836
        %s2838 = sand.u32 %s71, 1
        %s2839 = smul.addr %s2838, 1024
        %s2840 = scalar_lea.vmem [#allocation2], %s2839
        // Predicated region
        $region29: #{stem_fwd.1} parent=27 // pred_check
          %p2841 = pneg %p81
        $region30: #{stem_fwd.1} parent=27 // pred_check_branch
          %2843 = sbr.rel (%p2841) target = $region32
        $region31: #{stem_fwd.1} parent=27 // pred_region
          %s2845 = ssub.s32 16384, 16384
          %2846 = vsyncadd %s2837, %s2845
          %s2847 = smul.addr %s16, 128
          %s2848 = smul.addr %s2847, 128
          %s2849 = scalar_lea.hbm %s2, %s2848
          %s2850 = sshll.u32 %s2840, 4
          %s2851 = int_to_ptr.vmem [resolvable:$true] %s2850
          %2856 = dma.vmem_to_hbm [thread:$0]  %s2851, 16384, %s2849, %s2837, 128, 128, 8
        $region32: #{stem_fwd.1} parent=27 // pred_fallthru
          _
      $region28: #{stem_fwd.1} parent=5 // pred_fallthru
        _
      %p2857 = scmp.le.s32.totalorder 2, %s11
      // Predicated region
      $region33: #{stem_fwd.1} parent=5 // pred_check
        %p2858 = pneg %p2857
      $region34: #{stem_fwd.1} parent=5 // pred_check_branch
        %2860 = sbr.rel (%p2858) target = $region36
      $region35: #{stem_fwd.1} parent=5 // pred_region
        %s2861 = ssub.s32 %s11, 2
        // Predicated region
        $region37: #{stem_fwd.1} parent=35 // pred_check
          %p2862 = pneg %p87
        $region38: #{stem_fwd.1} parent=35 // pred_check_branch
          %2864 = sbr.rel (%p2862) target = $region40
        $region39: #{stem_fwd.1} parent=35 // pred_region
          %s2865 = sand.u32 %s72, 1
          %s2866 = scalar_lea.sflag [#allocation3], %s2865
          %s2867 = sand.u32 %s72, 1
          %s2868 = smul.addr %s2867, 1024
          %s2869 = scalar_lea.vmem [#allocation2], %s2868
          %2870 = dma.done %s2866, 16384
        $region40: #{stem_fwd.1} parent=35 // pred_fallthru
          _
      $region36: #{stem_fwd.1} parent=5 // pred_fallthru
        _
    $region6: #{stem_fwd.1} parent=1 // loop_footer
      %s15 = sadd.s32 1, %s11
    $region7: #{stem_fwd.1} parent=1 // loop_footer_branch
      %10 = sbr.rel target = $region3
    $region8: #{stem_fwd.1} parent=1 // loop_exit
      _
    %2871 = vsyncpa [#allocation3], 1
    %s2872 = scalar_lea.sflag [#allocation3], 1
    %2873 = vsyncpa %s2872, 1

</llo_original>
